<compile_context>
chip_gen: v7x
topology: tpu7x:2x2x1
jax: 0.10.0
libtpu: 0.0.40
codegen_flags: <defaults>
</compile_context>

<pallas_src>
import functools

import jax
import jax.numpy as jnp
from jax.experimental import pallas as pl
from jax.experimental.pallas import tpu as pltpu
from jax.scipy.linalg import block_diag

EPS = 1e-5
LEAKY_SLOPE = 0.01


# --------------------------------------------------------------------------
# In-kernel helpers
# --------------------------------------------------------------------------

def _ln_lrelu(h, g, bt):
    # Plain LayerNorm over the last axis (f32 math) + LeakyReLU(0.01).
    mu = jnp.mean(h, axis=-1, keepdims=True)
    dev = h - mu
    var = jnp.mean(dev * dev, axis=-1, keepdims=True)
    h = dev * jax.lax.rsqrt(var + EPS) * g + bt
    return jnp.where(h >= 0, h, LEAKY_SLOPE * h)


# --------------------------------------------------------------------------
# Pallas kernels
# --------------------------------------------------------------------------

def _in_mlps_kernel(x_ref,
                    w1_ref, b1_ref, g1_ref, bt1_ref,
                    w2s_ref, b2_ref, g2_ref, bt2_ref,
                    w3s_ref, b3_ref, g3_ref, bt3_ref,
                    o_ref, *, n_keys, dm):
    # Fused per-input-key MLPs in ONE kernel (activations never leave VMEM).
    # Layer 1: one block-diagonal matmul (per-key input widths differ; the zero
    # blocks are tiny).  Layers 2-3: per-key (dm, dm) matmuls -- no
    # block-diagonal zero FLOPs -- with plain per-key LayerNorms (no pseg).
    x = x_ref[...].astype(jnp.bfloat16)
    h1 = jnp.dot(x, w1_ref[...], preferred_element_type=jnp.float32) + b1_ref[...]
    g1, bt1 = g1_ref[...], bt1_ref[...]
    b2, g2, bt2 = b2_ref[...], g2_ref[...], bt2_ref[...]
    b3, g3, bt3 = b3_ref[...], g3_ref[...], bt3_ref[...]
    outs = []
    for k in range(n_keys):
        sl = slice(k * dm, (k + 1) * dm)
        hk = _ln_lrelu(h1[:, sl], g1[:, sl], bt1[:, sl])
        hk = jnp.dot(hk.astype(jnp.bfloat16), w2s_ref[k],
                     preferred_element_type=jnp.float32) + b2[:, sl]
        hk = _ln_lrelu(hk, g2[:, sl], bt2[:, sl])
        hk = jnp.dot(hk.astype(jnp.bfloat16), w3s_ref[k],
                     preferred_element_type=jnp.float32) + b3[:, sl]
        hk = _ln_lrelu(hk, g3[:, sl], bt3[:, sl])
        outs.append(hk)
    o_ref[...] = jnp.concatenate(outs, axis=-1)


def _out_mlp_proj_kernel(h_ref, c_ref,
                         w1a_ref, w1b_ref, b1_ref, g1_ref, bt1_ref,
                         w2_ref, b2_ref, g2_ref, bt2_ref,
                         w3_ref, b3_ref, g3_ref, bt3_ref,
                         wp_ref, bp_ref, o_ref):
    # out_mlp (3 layers) + all output projections fused in one kernel.
    # Conditioning enters via a split first-layer weight (h@w1a + c@w1b); the
    # projection slab wp is lane-padded to a 128 multiple for unmasked stores.
    h = (jnp.dot(h_ref[...].astype(jnp.bfloat16), w1a_ref[...],
                 preferred_element_type=jnp.float32)
         + jnp.dot(c_ref[...].astype(jnp.bfloat16), w1b_ref[...],
                   preferred_element_type=jnp.float32)
         + b1_ref[...])
    h = _ln_lrelu(h, g1_ref[...], bt1_ref[...])
    for w, b, g, bt in ((w2_ref, b2_ref, g2_ref, bt2_ref),
                        (w3_ref, b3_ref, g3_ref, bt3_ref)):
        h = jnp.dot(h.astype(jnp.bfloat16), w[...],
                    preferred_element_type=jnp.float32) + b[...]
        h = _ln_lrelu(h, g[...], bt[...])
    o_ref[...] = (jnp.dot(h.astype(jnp.bfloat16), wp_ref[...],
                          preferred_element_type=jnp.float32) + bp_ref[...])


def _s4_block_kernel(uf_ref, ut_ref, kpad_ref, d_ref,
                     woa_ref, boa_ref, wob_ref, bob_ref, g_ref, bt_ref,
                     o_ref, acc_ref):
    # One full S4 block for a tile of Lt output time steps:
    #   causal depthwise SSM conv (K only, no Toeplitz) + D*u skip -> GELU
    #   -> single merged-batch GLU matmul pair -> residual -> post-LayerNorm.
    B, Lt, H = ut_ref.shape
    L = uf_ref.shape[1]
    P = L - 1                         # leading zero rows in kpad
    l0 = pl.program_id(0) * Lt

    acc_ref[...] = jnp.zeros_like(acc_ref)        # (B*Lt, H) f32 conv accumulator

    # y[b, l] += K[(l0+l) - s] * u[b, s]   for s <= l0+l.
    # kpad has L-1 leading zero rows, so negative lags contribute exactly 0 and
    # the slice start P + l0 - s stays >= 0 for every s < l0 + Lt (causal bound
    # on the loop also skips source steps that cannot reach this tile).
    @pl.loop(0, l0 + Lt)
    def _conv_step(s):
        krows = kpad_ref[pl.ds(P + l0 - s, Lt), :]          # (Lt, H)
        u_s = uf_ref[:, pl.ds(s, 1), :]                      # (B, 1, H)
        for b in range(B):                                   # static, disjoint rows
            r0 = b * Lt
            acc_ref[pl.ds(r0, Lt), :] = acc_ref[pl.ds(r0, Lt), :] + krows * u_s[b]

    # D*u skip + GELU, written back into the merged (B*Lt, H) scratch.
    d = d_ref[...]
    for b in range(B):
        r0 = b * Lt
        acc_ref[pl.ds(r0, Lt), :] = jax.nn.gelu(
            acc_ref[pl.ds(r0, Lt), :] + ut_ref[b] * d, approximate=True)
        # TODO(synk): torch GELU is exact erf; tanh approximation used here.

    # ONE pair of (B*Lt, H) x (H, H) GLU matmuls on the MXU (bf16 in, f32 acc).
    # TODO(synk): fuse woa/wob into one (H, 2H) matmul when H % 128 == 0.
    yb = acc_ref[...].astype(jnp.bfloat16)
    a = jnp.dot(yb, woa_ref[...], preferred_element_type=jnp.float32) + boa_ref[...]
    c = jnp.dot(yb, wob_ref[...], preferred_element_type=jnp.float32) + bob_ref[...]
    gate = a * jax.nn.sigmoid(c)                             # (B*Lt, H)

    g, bt = g_ref[...], bt_ref[...]
    for b in range(B):                                       # residual + post-LN (row-wise)
        z = gate[b * Lt:(b + 1) * Lt, :] + ut_ref[b]
        mu = jnp.mean(z, axis=-1, keepdims=True)
        dev = z - mu
        var = jnp.mean(dev * dev, axis=-1, keepdims=True)
        o_ref[b] = dev * jax.lax.rsqrt(var + EPS) * g + bt


# --------------------------------------------------------------------------
# Tiling / VMEM helpers and pallas_call wrappers
# --------------------------------------------------------------------------

def _const_spec(a):
    nd = a.ndim
    return pl.BlockSpec(a.shape, lambda *_: (0,) * nd)


def _vmem_budget_bytes():
    # Physical VMEM per core: 128 MiB on v5e/v6e, 64 MiB on v7x.
    try:
        return int(pltpu.get_tpu_info().vmem_capacity_bytes)
    except Exception:
        return 64 << 20                       # conservative (v7x-sized) fallback


def _mosaic_params(budget):
    # Raise the scoped-VMEM limit (v5e default ~16 MiB) while staying under
    # physical capacity on every generation.
    return pltpu.CompilerParams(dimension_semantics=("parallel",),
                                vmem_limit_bytes=int(budget * 0.85))


def _pick_tile(n, *, max_tile, row_bytes=0, budget=None, min_rows=8):
    # Largest power-of-two tile <= max_tile dividing n, shrunk so the
    # double-buffered row-tiled streams stay within ~1/3 of the VMEM budget,
    # preferring >= 4 grid steps (2 per TensorCore on v7x), then >= 2, then any.
    if budget is None:
        budget = _vmem_budget_bytes()
    cap = max_tile
    while row_bytes and cap > min_rows and 2 * row_bytes * cap > budget // 3:
        cap //= 2
    for min_steps in (4, 2, 1):
        c = cap
        while c >= min_rows:
            if n % c == 0 and n // c >= min_steps:
                return c
            c //= 2
    return n


def fused_in_mlps_forward(x2d, p, n_keys, d_model):
    M, din = x2d.shape
    H = n_keys * d_model
    budget = _vmem_budget_bytes()
    mr = _pick_tile(M, max_tile=1024, row_bytes=4 * (din + 4 * H), budget=budget)
    args = (x2d,
            p['w1'], p['b1'], p['g1'], p['bt1'],
            p['w2s'], p['b2'], p['g2'], p['bt2'],
            p['w3s'], p['b3'], p['g3'], p['bt3'])
    in_specs = ([pl.BlockSpec((mr, din), lambda i: (i, 0))]
                + [_const_spec(a) for a in args[1:]])
    kern = functools.partial(_in_mlps_kernel, n_keys=n_keys, dm=d_model)
    return pl.pallas_call(
        kern,
        grid=(M // mr,),
        in_specs=in_specs,
        out_specs=pl.BlockSpec((mr, H), lambda i: (i, 0)),
        out_shape=jax.ShapeDtypeStruct((M, H), jnp.float32),
        compiler_params=_mosaic_params(budget),
    )(*args)


def out_mlp_proj_forward(h2d, cond2d, p):
    M, H = h2d.shape
    dc = cond2d.shape[-1]
    dout_p = p['bp'].shape[-1]                 # lane-padded projection width
    budget = _vmem_budget_bytes()
    mr = _pick_tile(M, max_tile=1024, row_bytes=4 * (3 * H + dc + 2 * dout_p),
                    budget=budget)
    args = (h2d, cond2d,
            p['w1a'], p['w1b'], p['b1'], p['g1'], p['bt1'],
            p['w2'], p['b2'], p['g2'], p['bt2'],
            p['w3'], p['b3'], p['g3'], p['bt3'],
            p['wp'], p['bp'])
    in_specs = ([pl.BlockSpec((mr, H), lambda i: (i, 0)),
                 pl.BlockSpec((mr, dc), lambda i: (i, 0))]
                + [_const_spec(a) for a in args[2:]])
    return pl.pallas_call(
        _out_mlp_proj_kernel,
        grid=(M // mr,),
        in_specs=in_specs,
        out_specs=pl.BlockSpec((mr, dout_p), lambda i: (i, 0)),
        out_shape=jax.ShapeDtypeStruct((M, dout_p), jnp.float32),
        compiler_params=_mosaic_params(budget),
    )(*args)


def s4_block_forward(u, blk):
    B, L, H = u.shape
    budget = _vmem_budget_bytes()
    const_bytes = (2 * B * L * H * 4       # full-u history (double-buffered input)
                   + 2 * 2 * L * H * 4     # kpad
                   + 2 * 2 * H * H * 2     # GLU weights (bf16)
                   + 16 * H * 4)           # small vectors
    row_bytes = 4 * B * H * 4              # ut in + 2x out + f32 conv scratch per row
    lt = _pick_tile(L, max_tile=512, row_bytes=row_bytes,
                    budget=max(budget - const_bytes, budget // 8))
    args = (u, u, blk['kpad'], blk['D'],
            blk['woa'], blk['boa'], blk['wob'], blk['bob'], blk['g'], blk['bt'])
    in_specs = ([pl.BlockSpec((B, L, H), lambda i: (0, 0, 0)),    # full u (conv history)
                 pl.BlockSpec((B, lt, H), lambda i: (0, i, 0))]   # u tile (skip/residual)
                + [_const_spec(a) for a in args[2:]])
    return pl.pallas_call(
        _s4_block_kernel,
        grid=(L // lt,),
        in_specs=in_specs,
        out_specs=pl.BlockSpec((B, lt, H), lambda i: (0, i, 0)),
        out_shape=jax.ShapeDtypeStruct((B, L, H), jnp.float32),
        scratch_shapes=[pltpu.VMEM((B * lt, H), jnp.float32)],
        compiler_params=_mosaic_params(budget),
    )(*args)


# --------------------------------------------------------------------------
# Deterministic parameter initialization (synthetic; no checkpoint load)
# --------------------------------------------------------------------------

def _init_linear(key, fan_in, fan_out):
    kw, kb = jax.random.split(key)
    bound = 1.0 / float(fan_in) ** 0.5
    w = jax.random.uniform(kw, (fan_in, fan_out), jnp.float32, -bound, bound)
    b = jax.random.uniform(kb, (1, fan_out), jnp.float32, -bound, bound)
    return w, b


def _init_mlp(key, in_size, hidden, n_layers=3):
    dims = [in_size] + [hidden] * n_layers
    keys = jax.random.split(key, n_layers)
    layers = []
    for i in range(n_layers):
        w, b = _init_linear(keys[i], dims[i], dims[i + 1])
        g = jnp.ones((1, dims[i + 1]), jnp.float32)
        bt = jnp.zeros((1, dims[i + 1]), jnp.float32)
        layers.append((w, b, g, bt))
    return layers


def _fuse_in_mlps(mlps):
    fused = {}
    # layer 1: block-diagonal (input widths differ per key; zero waste is tiny)
    fused['w1'] = block_diag(*[m[0][0] for m in mlps]).astype(jnp.bfloat16)
    fused['b1'] = jnp.concatenate([m[0][1] for m in mlps], axis=-1)
    fused['g1'] = jnp.concatenate([m[0][2] for m in mlps], axis=-1)
    fused['bt1'] = jnp.concatenate([m[0][3] for m in mlps], axis=-1)
    # layers 2-3: stacked per-key weights -> no block-diagonal zero FLOPs/DMA
    for li in (1, 2):
        fused[f'w{li + 1}s'] = jnp.stack([m[li][0] for m in mlps]).astype(jnp.bfloat16)
        fused[f'b{li + 1}'] = jnp.concatenate([m[li][1] for m in mlps], axis=-1)
        fused[f'g{li + 1}'] = jnp.concatenate([m[li][2] for m in mlps], axis=-1)
        fused[f'bt{li + 1}'] = jnp.concatenate([m[li][3] for m in mlps], axis=-1)
    return fused


def _fuse_out_mlp_proj(layers, projs, H):
    (w1, b1, g1, bt1), (w2, b2, g2, bt2), (w3, b3, g3, bt3) = layers
    wp = jnp.concatenate([w for (w, _) in projs], axis=-1)
    bp = jnp.concatenate([b for (_, b) in projs], axis=-1)
    dout = wp.shape[-1]
    dout_pad = max(128, ((dout + 127) // 128) * 128)   # lane-dense output slab
    wp = jnp.pad(wp, ((0, 0), (0, dout_pad - dout)))
    bp = jnp.pad(bp, ((0, 0), (0, dout_pad - dout)))
    return dict(w1a=w1[:H].astype(jnp.bfloat16), w1b=w1[H:].astype(jnp.bfloat16),
                b1=b1, g1=g1, bt1=bt1,
                w2=w2.astype(jnp.bfloat16), b2=b2, g2=g2, bt2=bt2,
                w3=w3.astype(jnp.bfloat16), b3=b3, g3=g3, bt3=bt3,
                wp=wp.astype(jnp.bfloat16), bp=bp)


def _init_s4_block(key, H, N, L):
    # Diagonal SSM surrogate (S4D-Lin init, ZOH) -> causal conv kernel K (L, H),
    # stored with L-1 leading zero rows (kpad) so the Pallas kernel can slice
    # shifted rows with a plain dynamic slice and never sees negative lags.
    k1, k2, k3, k4, k5 = jax.random.split(key, 5)
    n2 = max(N // 2, 1)
    A = -0.5 + 1j * jnp.pi * jnp.arange(n2, dtype=jnp.float32)
    C = (jax.random.normal(k1, (H, n2)) + 1j * jax.random.normal(k2, (H, n2))) * (0.5 ** 0.5)
    log_dt = jax.random.uniform(k3, (H,), jnp.float32,
                                minval=float(jnp.log(0.001)), maxval=float(jnp.log(0.1)))
    dt = jnp.exp(log_dt)
    dtA = dt[:, None] * A[None, :]
    dB = (jnp.exp(dtA) - 1.0) / A[None, :]                                 # ZOH, B = 1
    powers = jnp.exp(dtA[:, :, None] * jnp.arange(L, dtype=jnp.float32)[None, None, :])
    K = 2.0 * jnp.real(jnp.einsum('hn,hnl->hl', C * dB, powers))           # (H, L)
    kpad = jnp.concatenate([jnp.zeros((L - 1, H), jnp.float32), K.T,
                            jnp.zeros((1, H), jnp.float32)], axis=0)       # (2L, H)

    D = jax.random.normal(k4, (1, H), jnp.float32)
    wo, bo = _init_linear(k5, H, 2 * H)
    return dict(kpad=kpad, D=D,
                woa=wo[:, :H].astype(jnp.bfloat16), wob=wo[:, H:].astype(jnp.bfloat16),
                boa=bo[:, :H], bob=bo[:, H:],
                g=jnp.ones((1, H), jnp.float32),
                bt=jnp.zeros((1, H), jnp.float32))


# --------------------------------------------------------------------------
# Forward pass
# --------------------------------------------------------------------------

def s4_decoder_forward(params, x):
    B, L, _ = x['f0_scaled'].shape
    M = B * L

    # fused per-input-key MLPs (one pallas_call)
    xin = jnp.concatenate([x[k].reshape(M, -1) for k in params['input_keys']], axis=-1)
    hidden = fused_in_mlps_forward(xin, params['in_mlp_fused'],
                                   params['n_keys'], params['d_model'])    # (M, H)
    H = hidden.shape[-1]

    # S4 stack: one fused kernel per block, tiled over time
    h3 = hidden.reshape(B, L, H)
    for blk in params['s4_blocks']:
        h3 = s4_block_forward(h3, blk)

    # out_mlp + fused output projections (conditioning via split first layer)
    cond = jnp.concatenate([x['f0_scaled'], x['loudness_scaled']], axis=-1).reshape(M, -1)
    out = out_mlp_proj_forward(h3.reshape(M, H), cond, params['out_fused'])
    out = out[:, :sum(params['output_sizes'])]           # drop lane padding

    controls = {}
    off = 0
    for k, sz in zip(params['output_keys'], params['output_sizes']):
        controls[k] = out[:, off:off + sz].reshape(B, L, sz)
        off += sz
    controls['f0_hz'] = x['f0']
    return controls


# --------------------------------------------------------------------------

if __name__ == "__main__":
    B, L = 2, 16
    d_model, d_state, n_blocks = 16, 16, 1
    input_keys = ['f0_scaled', 'loudness_scaled', 'z']
    input_sizes = [1, 1, 16]
    output_keys = ['amplitude', 'harmonic_distribution', 'noise_bands']
    output_sizes = [1, 100, 65]
    n_keys = len(input_keys)
    H = n_keys * d_model

    root = jax.random.PRNGKey(0)
    k_par, k_in = jax.random.split(root)
    keys = jax.random.split(k_par, 8)

    in_mlps = [_init_mlp(keys[i], input_sizes[i], d_model) for i in range(n_keys)]
    out_mlp = _init_mlp(keys[5], H + 2, H)
    projs = [_init_linear(jax.random.fold_in(keys[6], v), H, output_sizes[v])
             for v in range(len(output_keys))]

    params = {
        'input_keys': input_keys,
        'output_keys': output_keys,
        'output_sizes': output_sizes,
        'n_keys': n_keys,
        'd_model': d_model,
        'in_mlp_fused': _fuse_in_mlps(in_mlps),
        's4_blocks': [_init_s4_block(keys[3 + i], H, d_state, L) for i in range(n_blocks)],
        'out_fused': _fuse_out_mlp_proj(out_mlp, projs, H),
    }

    ki = jax.random.split(k_in, 4)
    x = {
        'f0_scaled': jax.random.normal(ki[0], (B, L, 1), jnp.float32),
        'loudness_scaled': jax.random.normal(ki[1], (B, L, 1), jnp.float32),
        'z': jax.random.normal(ki[2], (B, L, input_sizes[2]), jnp.float32),
        'f0': jax.random.uniform(ki[3], (B, L, 1), jnp.float32, 50.0, 500.0),
    }

    controls = s4_decoder_forward(params, x)
    jax.block_until_ready(controls)
    print("KERNEL_OK")
</pallas_src>

<mosaic_0001>
module attributes {stable_mosaic.version = 11 : i64} {
  func.func @_in_mlps_kernel(%arg0: i32, %arg1: memref<8x18xf32, #tpu.memory_space<vmem>>, %arg2: memref<18x48xbf16, #tpu.memory_space<vmem>>, %arg3: memref<1x48xf32, #tpu.memory_space<vmem>>, %arg4: memref<1x48xf32, #tpu.memory_space<vmem>>, %arg5: memref<1x48xf32, #tpu.memory_space<vmem>>, %arg6: memref<3x16x16xbf16, #tpu.memory_space<vmem>>, %arg7: memref<1x48xf32, #tpu.memory_space<vmem>>, %arg8: memref<1x48xf32, #tpu.memory_space<vmem>>, %arg9: memref<1x48xf32, #tpu.memory_space<vmem>>, %arg10: memref<3x16x16xbf16, #tpu.memory_space<vmem>>, %arg11: memref<1x48xf32, #tpu.memory_space<vmem>>, %arg12: memref<1x48xf32, #tpu.memory_space<vmem>>, %arg13: memref<1x48xf32, #tpu.memory_space<vmem>>, %arg14: memref<8x48xf32, #tpu.memory_space<vmem>>) attributes {dimension_semantics = [#tpu.dimension_semantics<parallel>], iteration_bounds = array<i64: 4>, scalar_prefetch = 0 : i64, scratch_operands = 0 : i64, tpu.core_type = #tpu.core_type<tc>, window_params = [{transform_indices = @transform_0, window_bounds = array<i64: 8, 18>}, {pipeline_mode = #tpu.pipeline_mode<synchronous>, transform_indices = @transform_1, window_bounds = array<i64: 18, 48>}, {pipeline_mode = #tpu.pipeline_mode<synchronous>, transform_indices = @transform_2, window_bounds = array<i64: 1, 48>}, {pipeline_mode = #tpu.pipeline_mode<synchronous>, transform_indices = @transform_3, window_bounds = array<i64: 1, 48>}, {pipeline_mode = #tpu.pipeline_mode<synchronous>, transform_indices = @transform_4, window_bounds = array<i64: 1, 48>}, {pipeline_mode = #tpu.pipeline_mode<synchronous>, transform_indices = @transform_5, window_bounds = array<i64: 3, 16, 16>}, {pipeline_mode = #tpu.pipeline_mode<synchronous>, transform_indices = @transform_6, window_bounds = array<i64: 1, 48>}, {pipeline_mode = #tpu.pipeline_mode<synchronous>, transform_indices = @transform_7, window_bounds = array<i64: 1, 48>}, {pipeline_mode = #tpu.pipeline_mode<synchronous>, transform_indices = @transform_8, window_bounds = array<i64: 1, 48>}, {pipeline_mode = #tpu.pipeline_mode<synchronous>, transform_indices = @transform_9, window_bounds = array<i64: 3, 16, 16>}, {pipeline_mode = #tpu.pipeline_mode<synchronous>, transform_indices = @transform_10, window_bounds = array<i64: 1, 48>}, {pipeline_mode = #tpu.pipeline_mode<synchronous>, transform_indices = @transform_11, window_bounds = array<i64: 1, 48>}, {pipeline_mode = #tpu.pipeline_mode<synchronous>, transform_indices = @transform_12, window_bounds = array<i64: 1, 48>}, {transform_indices = @transform_13, window_bounds = array<i64: 8, 48>}]} {
    %c0 = arith.constant 0 : index
    %c0_0 = arith.constant 0 : index
    %0 = vector.load %arg1[%c0, %c0_0] : memref<8x18xf32, #tpu.memory_space<vmem>>, vector<8x18xf32>
    %1 = arith.truncf %0 : vector<8x18xf32> to vector<8x18xbf16>
    %c0_1 = arith.constant 0 : index
    %c0_2 = arith.constant 0 : index
    %2 = vector.load %arg2[%c0_1, %c0_2] : memref<18x48xbf16, #tpu.memory_space<vmem>>, vector<18x48xbf16>
    %cst = arith.constant dense<0.000000e+00> : vector<8x48xf32>
    %3 = tpu.matmul %1, %2, %cst {dimension_numbers = #tpu.dot_dimension_numbers<[1], [0], [0], [1], [0, 0, 1, 1], [], []>} : vector<8x18xbf16>, vector<18x48xbf16>, vector<8x48xf32> -> vector<8x48xf32>
    %c0_3 = arith.constant 0 : index
    %c0_4 = arith.constant 0 : index
    %4 = vector.load %arg3[%c0_3, %c0_4] : memref<1x48xf32, #tpu.memory_space<vmem>>, vector<1x48xf32>
    %5 = vector.broadcast %4 : vector<1x48xf32> to vector<8x48xf32>
    %6 = arith.addf %3, %5 : vector<8x48xf32>
    %c0_5 = arith.constant 0 : index
    %c0_6 = arith.constant 0 : index
    %7 = vector.load %arg4[%c0_5, %c0_6] : memref<1x48xf32, #tpu.memory_space<vmem>>, vector<1x48xf32>
    %c0_7 = arith.constant 0 : index
    %c0_8 = arith.constant 0 : index
    %8 = vector.load %arg5[%c0_7, %c0_8] : memref<1x48xf32, #tpu.memory_space<vmem>>, vector<1x48xf32>
    %c0_9 = arith.constant 0 : index
    %c0_10 = arith.constant 0 : index
    %9 = vector.load %arg7[%c0_9, %c0_10] : memref<1x48xf32, #tpu.memory_space<vmem>>, vector<1x48xf32>
    %c0_11 = arith.constant 0 : index
    %c0_12 = arith.constant 0 : index
    %10 = vector.load %arg8[%c0_11, %c0_12] : memref<1x48xf32, #tpu.memory_space<vmem>>, vector<1x48xf32>
    %c0_13 = arith.constant 0 : index
    %c0_14 = arith.constant 0 : index
    %11 = vector.load %arg9[%c0_13, %c0_14] : memref<1x48xf32, #tpu.memory_space<vmem>>, vector<1x48xf32>
    %c0_15 = arith.constant 0 : index
    %c0_16 = arith.constant 0 : index
    %12 = vector.load %arg11[%c0_15, %c0_16] : memref<1x48xf32, #tpu.memory_space<vmem>>, vector<1x48xf32>
    %c0_17 = arith.constant 0 : index
    %c0_18 = arith.constant 0 : index
    %13 = vector.load %arg12[%c0_17, %c0_18] : memref<1x48xf32, #tpu.memory_space<vmem>>, vector<1x48xf32>
    %c0_19 = arith.constant 0 : index
    %c0_20 = arith.constant 0 : index
    %14 = vector.load %arg13[%c0_19, %c0_20] : memref<1x48xf32, #tpu.memory_space<vmem>>, vector<1x48xf32>
    %15 = vector.extract_strided_slice %6 {offsets = [0, 0], sizes = [8, 16], strides = [1, 1]} : vector<8x48xf32> to vector<8x16xf32>
    %16 = vector.extract_strided_slice %7 {offsets = [0, 0], sizes = [1, 16], strides = [1, 1]} : vector<1x48xf32> to vector<1x16xf32>
    %17 = vector.extract_strided_slice %8 {offsets = [0, 0], sizes = [1, 16], strides = [1, 1]} : vector<1x48xf32> to vector<1x16xf32>
    %cst_21 = arith.constant dense<0.000000e+00> : vector<8xf32>
    %18 = vector.multi_reduction <add>, %15, %cst_21 [1] : vector<8x16xf32> to vector<8xf32>
    %19 = vector.shape_cast %18 : vector<8xf32> to vector<8x1xf32>
    %cst_22 = arith.constant 1.600000e+01 : f32
    %20 = vector.broadcast %cst_22 : f32 to vector<8x1xf32>
    %21 = arith.divf %19, %20 : vector<8x1xf32>
    %22 = vector.broadcast %21 : vector<8x1xf32> to vector<8x16xf32>
    %23 = arith.subf %15, %22 : vector<8x16xf32>
    %24 = arith.mulf %23, %23 : vector<8x16xf32>
    %cst_23 = arith.constant dense<0.000000e+00> : vector<8xf32>
    %25 = vector.multi_reduction <add>, %24, %cst_23 [1] : vector<8x16xf32> to vector<8xf32>
    %26 = vector.shape_cast %25 : vector<8xf32> to vector<8x1xf32>
    %cst_24 = arith.constant 1.600000e+01 : f32
    %27 = vector.broadcast %cst_24 : f32 to vector<8x1xf32>
    %28 = arith.divf %26, %27 : vector<8x1xf32>
    %cst_25 = arith.constant 9.99999974E-6 : f32
    %29 = vector.broadcast %cst_25 : f32 to vector<8x1xf32>
    %30 = arith.addf %28, %29 : vector<8x1xf32>
    %31 = math.rsqrt %30 : vector<8x1xf32>
    %32 = vector.broadcast %31 : vector<8x1xf32> to vector<8x16xf32>
    %33 = arith.mulf %23, %32 : vector<8x16xf32>
    %34 = vector.broadcast %16 : vector<1x16xf32> to vector<8x16xf32>
    %35 = arith.mulf %33, %34 : vector<8x16xf32>
    %36 = vector.broadcast %17 : vector<1x16xf32> to vector<8x16xf32>
    %37 = arith.addf %35, %36 : vector<8x16xf32>
    %cst_26 = arith.constant 0.000000e+00 : f32
    %38 = vector.broadcast %cst_26 : f32 to vector<8x16xf32>
    %39 = arith.cmpf oge, %37, %38 : vector<8x16xf32>
    %cst_27 = arith.constant 0.00999999977 : f32
    %40 = vector.broadcast %cst_27 : f32 to vector<8x16xf32>
    %41 = arith.mulf %40, %37 : vector<8x16xf32>
    %42 = arith.select %39, %37, %41 : vector<8x16xi1>, vector<8x16xf32>
    %43 = arith.truncf %42 : vector<8x16xf32> to vector<8x16xbf16>
    %c0_28 = arith.constant 0 : index
    %c0_29 = arith.constant 0 : index
    %c0_30 = arith.constant 0 : index
    %44 = vector.load %arg6[%c0_28, %c0_29, %c0_30] : memref<3x16x16xbf16, #tpu.memory_space<vmem>>, vector<1x16x16xbf16>
    %45 = vector.shape_cast %44 : vector<1x16x16xbf16> to vector<16x16xbf16>
    %cst_31 = arith.constant dense<0.000000e+00> : vector<8x16xf32>
    %46 = tpu.matmul %43, %45, %cst_31 {dimension_numbers = #tpu.dot_dimension_numbers<[1], [0], [0], [1], [0, 0, 1, 1], [], []>} : vector<8x16xbf16>, vector<16x16xbf16>, vector<8x16xf32> -> vector<8x16xf32>
    %47 = vector.extract_strided_slice %9 {offsets = [0, 0], sizes = [1, 16], strides = [1, 1]} : vector<1x48xf32> to vector<1x16xf32>
    %48 = vector.broadcast %47 : vector<1x16xf32> to vector<8x16xf32>
    %49 = arith.addf %46, %48 : vector<8x16xf32>
    %50 = vector.extract_strided_slice %10 {offsets = [0, 0], sizes = [1, 16], strides = [1, 1]} : vector<1x48xf32> to vector<1x16xf32>
    %51 = vector.extract_strided_slice %11 {offsets = [0, 0], sizes = [1, 16], strides = [1, 1]} : vector<1x48xf32> to vector<1x16xf32>
    %cst_32 = arith.constant dense<0.000000e+00> : vector<8xf32>
    %52 = vector.multi_reduction <add>, %49, %cst_32 [1] : vector<8x16xf32> to vector<8xf32>
    %53 = vector.shape_cast %52 : vector<8xf32> to vector<8x1xf32>
    %cst_33 = arith.constant 1.600000e+01 : f32
    %54 = vector.broadcast %cst_33 : f32 to vector<8x1xf32>
    %55 = arith.divf %53, %54 : vector<8x1xf32>
    %56 = vector.broadcast %55 : vector<8x1xf32> to vector<8x16xf32>
    %57 = arith.subf %49, %56 : vector<8x16xf32>
    %58 = arith.mulf %57, %57 : vector<8x16xf32>
    %cst_34 = arith.constant dense<0.000000e+00> : vector<8xf32>
    %59 = vector.multi_reduction <add>, %58, %cst_34 [1] : vector<8x16xf32> to vector<8xf32>
    %60 = vector.shape_cast %59 : vector<8xf32> to vector<8x1xf32>
    %cst_35 = arith.constant 1.600000e+01 : f32
    %61 = vector.broadcast %cst_35 : f32 to vector<8x1xf32>
    %62 = arith.divf %60, %61 : vector<8x1xf32>
    %cst_36 = arith.constant 9.99999974E-6 : f32
    %63 = vector.broadcast %cst_36 : f32 to vector<8x1xf32>
    %64 = arith.addf %62, %63 : vector<8x1xf32>
    %65 = math.rsqrt %64 : vector<8x1xf32>
    %66 = vector.broadcast %65 : vector<8x1xf32> to vector<8x16xf32>
    %67 = arith.mulf %57, %66 : vector<8x16xf32>
    %68 = vector.broadcast %50 : vector<1x16xf32> to vector<8x16xf32>
    %69 = arith.mulf %67, %68 : vector<8x16xf32>
    %70 = vector.broadcast %51 : vector<1x16xf32> to vector<8x16xf32>
    %71 = arith.addf %69, %70 : vector<8x16xf32>
    %cst_37 = arith.constant 0.000000e+00 : f32
    %72 = vector.broadcast %cst_37 : f32 to vector<8x16xf32>
    %73 = arith.cmpf oge, %71, %72 : vector<8x16xf32>
    %cst_38 = arith.constant 0.00999999977 : f32
    %74 = vector.broadcast %cst_38 : f32 to vector<8x16xf32>
    %75 = arith.mulf %74, %71 : vector<8x16xf32>
    %76 = arith.select %73, %71, %75 : vector<8x16xi1>, vector<8x16xf32>
    %77 = arith.truncf %76 : vector<8x16xf32> to vector<8x16xbf16>
    %c0_39 = arith.constant 0 : index
    %c0_40 = arith.constant 0 : index
    %c0_41 = arith.constant 0 : index
    %78 = vector.load %arg10[%c0_39, %c0_40, %c0_41] : memref<3x16x16xbf16, #tpu.memory_space<vmem>>, vector<1x16x16xbf16>
    %79 = vector.shape_cast %78 : vector<1x16x16xbf16> to vector<16x16xbf16>
    %cst_42 = arith.constant dense<0.000000e+00> : vector<8x16xf32>
    %80 = tpu.matmul %77, %79, %cst_42 {dimension_numbers = #tpu.dot_dimension_numbers<[1], [0], [0], [1], [0, 0, 1, 1], [], []>} : vector<8x16xbf16>, vector<16x16xbf16>, vector<8x16xf32> -> vector<8x16xf32>
    %81 = vector.extract_strided_slice %12 {offsets = [0, 0], sizes = [1, 16], strides = [1, 1]} : vector<1x48xf32> to vector<1x16xf32>
    %82 = vector.broadcast %81 : vector<1x16xf32> to vector<8x16xf32>
    %83 = arith.addf %80, %82 : vector<8x16xf32>
    %84 = vector.extract_strided_slice %13 {offsets = [0, 0], sizes = [1, 16], strides = [1, 1]} : vector<1x48xf32> to vector<1x16xf32>
    %85 = vector.extract_strided_slice %14 {offsets = [0, 0], sizes = [1, 16], strides = [1, 1]} : vector<1x48xf32> to vector<1x16xf32>
    %cst_43 = arith.constant dense<0.000000e+00> : vector<8xf32>
    %86 = vector.multi_reduction <add>, %83, %cst_43 [1] : vector<8x16xf32> to vector<8xf32>
    %87 = vector.shape_cast %86 : vector<8xf32> to vector<8x1xf32>
    %cst_44 = arith.constant 1.600000e+01 : f32
    %88 = vector.broadcast %cst_44 : f32 to vector<8x1xf32>
    %89 = arith.divf %87, %88 : vector<8x1xf32>
    %90 = vector.broadcast %89 : vector<8x1xf32> to vector<8x16xf32>
    %91 = arith.subf %83, %90 : vector<8x16xf32>
    %92 = arith.mulf %91, %91 : vector<8x16xf32>
    %cst_45 = arith.constant dense<0.000000e+00> : vector<8xf32>
    %93 = vector.multi_reduction <add>, %92, %cst_45 [1] : vector<8x16xf32> to vector<8xf32>
    %94 = vector.shape_cast %93 : vector<8xf32> to vector<8x1xf32>
    %cst_46 = arith.constant 1.600000e+01 : f32
    %95 = vector.broadcast %cst_46 : f32 to vector<8x1xf32>
    %96 = arith.divf %94, %95 : vector<8x1xf32>
    %cst_47 = arith.constant 9.99999974E-6 : f32
    %97 = vector.broadcast %cst_47 : f32 to vector<8x1xf32>
    %98 = arith.addf %96, %97 : vector<8x1xf32>
    %99 = math.rsqrt %98 : vector<8x1xf32>
    %100 = vector.broadcast %99 : vector<8x1xf32> to vector<8x16xf32>
    %101 = arith.mulf %91, %100 : vector<8x16xf32>
    %102 = vector.broadcast %84 : vector<1x16xf32> to vector<8x16xf32>
    %103 = arith.mulf %101, %102 : vector<8x16xf32>
    %104 = vector.broadcast %85 : vector<1x16xf32> to vector<8x16xf32>
    %105 = arith.addf %103, %104 : vector<8x16xf32>
    %cst_48 = arith.constant 0.000000e+00 : f32
    %106 = vector.broadcast %cst_48 : f32 to vector<8x16xf32>
    %107 = arith.cmpf oge, %105, %106 : vector<8x16xf32>
    %cst_49 = arith.constant 0.00999999977 : f32
    %108 = vector.broadcast %cst_49 : f32 to vector<8x16xf32>
    %109 = arith.mulf %108, %105 : vector<8x16xf32>
    %110 = arith.select %107, %105, %109 : vector<8x16xi1>, vector<8x16xf32>
    %111 = vector.extract_strided_slice %6 {offsets = [0, 16], sizes = [8, 16], strides = [1, 1]} : vector<8x48xf32> to vector<8x16xf32>
    %112 = vector.extract_strided_slice %7 {offsets = [0, 16], sizes = [1, 16], strides = [1, 1]} : vector<1x48xf32> to vector<1x16xf32>
    %113 = vector.extract_strided_slice %8 {offsets = [0, 16], sizes = [1, 16], strides = [1, 1]} : vector<1x48xf32> to vector<1x16xf32>
    %cst_50 = arith.constant dense<0.000000e+00> : vector<8xf32>
    %114 = vector.multi_reduction <add>, %111, %cst_50 [1] : vector<8x16xf32> to vector<8xf32>
    %115 = vector.shape_cast %114 : vector<8xf32> to vector<8x1xf32>
    %cst_51 = arith.constant 1.600000e+01 : f32
    %116 = vector.broadcast %cst_51 : f32 to vector<8x1xf32>
    %117 = arith.divf %115, %116 : vector<8x1xf32>
    %118 = vector.broadcast %117 : vector<8x1xf32> to vector<8x16xf32>
    %119 = arith.subf %111, %118 : vector<8x16xf32>
    %120 = arith.mulf %119, %119 : vector<8x16xf32>
    %cst_52 = arith.constant dense<0.000000e+00> : vector<8xf32>
    %121 = vector.multi_reduction <add>, %120, %cst_52 [1] : vector<8x16xf32> to vector<8xf32>
    %122 = vector.shape_cast %121 : vector<8xf32> to vector<8x1xf32>
    %cst_53 = arith.constant 1.600000e+01 : f32
    %123 = vector.broadcast %cst_53 : f32 to vector<8x1xf32>
    %124 = arith.divf %122, %123 : vector<8x1xf32>
    %cst_54 = arith.constant 9.99999974E-6 : f32
    %125 = vector.broadcast %cst_54 : f32 to vector<8x1xf32>
    %126 = arith.addf %124, %125 : vector<8x1xf32>
    %127 = math.rsqrt %126 : vector<8x1xf32>
    %128 = vector.broadcast %127 : vector<8x1xf32> to vector<8x16xf32>
    %129 = arith.mulf %119, %128 : vector<8x16xf32>
    %130 = vector.broadcast %112 : vector<1x16xf32> to vector<8x16xf32>
    %131 = arith.mulf %129, %130 : vector<8x16xf32>
    %132 = vector.broadcast %113 : vector<1x16xf32> to vector<8x16xf32>
    %133 = arith.addf %131, %132 : vector<8x16xf32>
    %cst_55 = arith.constant 0.000000e+00 : f32
    %134 = vector.broadcast %cst_55 : f32 to vector<8x16xf32>
    %135 = arith.cmpf oge, %133, %134 : vector<8x16xf32>
    %cst_56 = arith.constant 0.00999999977 : f32
    %136 = vector.broadcast %cst_56 : f32 to vector<8x16xf32>
    %137 = arith.mulf %136, %133 : vector<8x16xf32>
    %138 = arith.select %135, %133, %137 : vector<8x16xi1>, vector<8x16xf32>
    %139 = arith.truncf %138 : vector<8x16xf32> to vector<8x16xbf16>
    %c1 = arith.constant 1 : index
    %c0_57 = arith.constant 0 : index
    %c0_58 = arith.constant 0 : index
    %140 = vector.load %arg6[%c1, %c0_57, %c0_58] : memref<3x16x16xbf16, #tpu.memory_space<vmem>>, vector<1x16x16xbf16>
    %141 = vector.shape_cast %140 : vector<1x16x16xbf16> to vector<16x16xbf16>
    %cst_59 = arith.constant dense<0.000000e+00> : vector<8x16xf32>
    %142 = tpu.matmul %139, %141, %cst_59 {dimension_numbers = #tpu.dot_dimension_numbers<[1], [0], [0], [1], [0, 0, 1, 1], [], []>} : vector<8x16xbf16>, vector<16x16xbf16>, vector<8x16xf32> -> vector<8x16xf32>
    %143 = vector.extract_strided_slice %9 {offsets = [0, 16], sizes = [1, 16], strides = [1, 1]} : vector<1x48xf32> to vector<1x16xf32>
    %144 = vector.broadcast %143 : vector<1x16xf32> to vector<8x16xf32>
    %145 = arith.addf %142, %144 : vector<8x16xf32>
    %146 = vector.extract_strided_slice %10 {offsets = [0, 16], sizes = [1, 16], strides = [1, 1]} : vector<1x48xf32> to vector<1x16xf32>
    %147 = vector.extract_strided_slice %11 {offsets = [0, 16], sizes = [1, 16], strides = [1, 1]} : vector<1x48xf32> to vector<1x16xf32>
    %cst_60 = arith.constant dense<0.000000e+00> : vector<8xf32>
    %148 = vector.multi_reduction <add>, %145, %cst_60 [1] : vector<8x16xf32> to vector<8xf32>
    %149 = vector.shape_cast %148 : vector<8xf32> to vector<8x1xf32>
    %cst_61 = arith.constant 1.600000e+01 : f32
    %150 = vector.broadcast %cst_61 : f32 to vector<8x1xf32>
    %151 = arith.divf %149, %150 : vector<8x1xf32>
    %152 = vector.broadcast %151 : vector<8x1xf32> to vector<8x16xf32>
    %153 = arith.subf %145, %152 : vector<8x16xf32>
    %154 = arith.mulf %153, %153 : vector<8x16xf32>
    %cst_62 = arith.constant dense<0.000000e+00> : vector<8xf32>
    %155 = vector.multi_reduction <add>, %154, %cst_62 [1] : vector<8x16xf32> to vector<8xf32>
    %156 = vector.shape_cast %155 : vector<8xf32> to vector<8x1xf32>
    %cst_63 = arith.constant 1.600000e+01 : f32
    %157 = vector.broadcast %cst_63 : f32 to vector<8x1xf32>
    %158 = arith.divf %156, %157 : vector<8x1xf32>
    %cst_64 = arith.constant 9.99999974E-6 : f32
    %159 = vector.broadcast %cst_64 : f32 to vector<8x1xf32>
    %160 = arith.addf %158, %159 : vector<8x1xf32>
    %161 = math.rsqrt %160 : vector<8x1xf32>
    %162 = vector.broadcast %161 : vector<8x1xf32> to vector<8x16xf32>
    %163 = arith.mulf %153, %162 : vector<8x16xf32>
    %164 = vector.broadcast %146 : vector<1x16xf32> to vector<8x16xf32>
    %165 = arith.mulf %163, %164 : vector<8x16xf32>
    %166 = vector.broadcast %147 : vector<1x16xf32> to vector<8x16xf32>
    %167 = arith.addf %165, %166 : vector<8x16xf32>
    %cst_65 = arith.constant 0.000000e+00 : f32
    %168 = vector.broadcast %cst_65 : f32 to vector<8x16xf32>
    %169 = arith.cmpf oge, %167, %168 : vector<8x16xf32>
    %cst_66 = arith.constant 0.00999999977 : f32
    %170 = vector.broadcast %cst_66 : f32 to vector<8x16xf32>
    %171 = arith.mulf %170, %167 : vector<8x16xf32>
    %172 = arith.select %169, %167, %171 : vector<8x16xi1>, vector<8x16xf32>
    %173 = arith.truncf %172 : vector<8x16xf32> to vector<8x16xbf16>
    %c1_67 = arith.constant 1 : index
    %c0_68 = arith.constant 0 : index
    %c0_69 = arith.constant 0 : index
    %174 = vector.load %arg10[%c1_67, %c0_68, %c0_69] : memref<3x16x16xbf16, #tpu.memory_space<vmem>>, vector<1x16x16xbf16>
    %175 = vector.shape_cast %174 : vector<1x16x16xbf16> to vector<16x16xbf16>
    %cst_70 = arith.constant dense<0.000000e+00> : vector<8x16xf32>
    %176 = tpu.matmul %173, %175, %cst_70 {dimension_numbers = #tpu.dot_dimension_numbers<[1], [0], [0], [1], [0, 0, 1, 1], [], []>} : vector<8x16xbf16>, vector<16x16xbf16>, vector<8x16xf32> -> vector<8x16xf32>
    %177 = vector.extract_strided_slice %12 {offsets = [0, 16], sizes = [1, 16], strides = [1, 1]} : vector<1x48xf32> to vector<1x16xf32>
    %178 = vector.broadcast %177 : vector<1x16xf32> to vector<8x16xf32>
    %179 = arith.addf %176, %178 : vector<8x16xf32>
    %180 = vector.extract_strided_slice %13 {offsets = [0, 16], sizes = [1, 16], strides = [1, 1]} : vector<1x48xf32> to vector<1x16xf32>
    %181 = vector.extract_strided_slice %14 {offsets = [0, 16], sizes = [1, 16], strides = [1, 1]} : vector<1x48xf32> to vector<1x16xf32>
    %cst_71 = arith.constant dense<0.000000e+00> : vector<8xf32>
    %182 = vector.multi_reduction <add>, %179, %cst_71 [1] : vector<8x16xf32> to vector<8xf32>
    %183 = vector.shape_cast %182 : vector<8xf32> to vector<8x1xf32>
    %cst_72 = arith.constant 1.600000e+01 : f32
    %184 = vector.broadcast %cst_72 : f32 to vector<8x1xf32>
    %185 = arith.divf %183, %184 : vector<8x1xf32>
    %186 = vector.broadcast %185 : vector<8x1xf32> to vector<8x16xf32>
    %187 = arith.subf %179, %186 : vector<8x16xf32>
    %188 = arith.mulf %187, %187 : vector<8x16xf32>
    %cst_73 = arith.constant dense<0.000000e+00> : vector<8xf32>
    %189 = vector.multi_reduction <add>, %188, %cst_73 [1] : vector<8x16xf32> to vector<8xf32>
    %190 = vector.shape_cast %189 : vector<8xf32> to vector<8x1xf32>
    %cst_74 = arith.constant 1.600000e+01 : f32
    %191 = vector.broadcast %cst_74 : f32 to vector<8x1xf32>
    %192 = arith.divf %190, %191 : vector<8x1xf32>
    %cst_75 = arith.constant 9.99999974E-6 : f32
    %193 = vector.broadcast %cst_75 : f32 to vector<8x1xf32>
    %194 = arith.addf %192, %193 : vector<8x1xf32>
    %195 = math.rsqrt %194 : vector<8x1xf32>
    %196 = vector.broadcast %195 : vector<8x1xf32> to vector<8x16xf32>
    %197 = arith.mulf %187, %196 : vector<8x16xf32>
    %198 = vector.broadcast %180 : vector<1x16xf32> to vector<8x16xf32>
    %199 = arith.mulf %197, %198 : vector<8x16xf32>
    %200 = vector.broadcast %181 : vector<1x16xf32> to vector<8x16xf32>
    %201 = arith.addf %199, %200 : vector<8x16xf32>
    %cst_76 = arith.constant 0.000000e+00 : f32
    %202 = vector.broadcast %cst_76 : f32 to vector<8x16xf32>
    %203 = arith.cmpf oge, %201, %202 : vector<8x16xf32>
    %cst_77 = arith.constant 0.00999999977 : f32
    %204 = vector.broadcast %cst_77 : f32 to vector<8x16xf32>
    %205 = arith.mulf %204, %201 : vector<8x16xf32>
    %206 = arith.select %203, %201, %205 : vector<8x16xi1>, vector<8x16xf32>
    %207 = vector.extract_strided_slice %6 {offsets = [0, 32], sizes = [8, 16], strides = [1, 1]} : vector<8x48xf32> to vector<8x16xf32>
    %208 = vector.extract_strided_slice %7 {offsets = [0, 32], sizes = [1, 16], strides = [1, 1]} : vector<1x48xf32> to vector<1x16xf32>
    %209 = vector.extract_strided_slice %8 {offsets = [0, 32], sizes = [1, 16], strides = [1, 1]} : vector<1x48xf32> to vector<1x16xf32>
    %cst_78 = arith.constant dense<0.000000e+00> : vector<8xf32>
    %210 = vector.multi_reduction <add>, %207, %cst_78 [1] : vector<8x16xf32> to vector<8xf32>
    %211 = vector.shape_cast %210 : vector<8xf32> to vector<8x1xf32>
    %cst_79 = arith.constant 1.600000e+01 : f32
    %212 = vector.broadcast %cst_79 : f32 to vector<8x1xf32>
    %213 = arith.divf %211, %212 : vector<8x1xf32>
    %214 = vector.broadcast %213 : vector<8x1xf32> to vector<8x16xf32>
    %215 = arith.subf %207, %214 : vector<8x16xf32>
    %216 = arith.mulf %215, %215 : vector<8x16xf32>
    %cst_80 = arith.constant dense<0.000000e+00> : vector<8xf32>
    %217 = vector.multi_reduction <add>, %216, %cst_80 [1] : vector<8x16xf32> to vector<8xf32>
    %218 = vector.shape_cast %217 : vector<8xf32> to vector<8x1xf32>
    %cst_81 = arith.constant 1.600000e+01 : f32
    %219 = vector.broadcast %cst_81 : f32 to vector<8x1xf32>
    %220 = arith.divf %218, %219 : vector<8x1xf32>
    %cst_82 = arith.constant 9.99999974E-6 : f32
    %221 = vector.broadcast %cst_82 : f32 to vector<8x1xf32>
    %222 = arith.addf %220, %221 : vector<8x1xf32>
    %223 = math.rsqrt %222 : vector<8x1xf32>
    %224 = vector.broadcast %223 : vector<8x1xf32> to vector<8x16xf32>
    %225 = arith.mulf %215, %224 : vector<8x16xf32>
    %226 = vector.broadcast %208 : vector<1x16xf32> to vector<8x16xf32>
    %227 = arith.mulf %225, %226 : vector<8x16xf32>
    %228 = vector.broadcast %209 : vector<1x16xf32> to vector<8x16xf32>
    %229 = arith.addf %227, %228 : vector<8x16xf32>
    %cst_83 = arith.constant 0.000000e+00 : f32
    %230 = vector.broadcast %cst_83 : f32 to vector<8x16xf32>
    %231 = arith.cmpf oge, %229, %230 : vector<8x16xf32>
    %cst_84 = arith.constant 0.00999999977 : f32
    %232 = vector.broadcast %cst_84 : f32 to vector<8x16xf32>
    %233 = arith.mulf %232, %229 : vector<8x16xf32>
    %234 = arith.select %231, %229, %233 : vector<8x16xi1>, vector<8x16xf32>
    %235 = arith.truncf %234 : vector<8x16xf32> to vector<8x16xbf16>
    %c2 = arith.constant 2 : index
    %c0_85 = arith.constant 0 : index
    %c0_86 = arith.constant 0 : index
    %236 = vector.load %arg6[%c2, %c0_85, %c0_86] : memref<3x16x16xbf16, #tpu.memory_space<vmem>>, vector<1x16x16xbf16>
    %237 = vector.shape_cast %236 : vector<1x16x16xbf16> to vector<16x16xbf16>
    %cst_87 = arith.constant dense<0.000000e+00> : vector<8x16xf32>
    %238 = tpu.matmul %235, %237, %cst_87 {dimension_numbers = #tpu.dot_dimension_numbers<[1], [0], [0], [1], [0, 0, 1, 1], [], []>} : vector<8x16xbf16>, vector<16x16xbf16>, vector<8x16xf32> -> vector<8x16xf32>
    %239 = vector.extract_strided_slice %9 {offsets = [0, 32], sizes = [1, 16], strides = [1, 1]} : vector<1x48xf32> to vector<1x16xf32>
    %240 = vector.broadcast %239 : vector<1x16xf32> to vector<8x16xf32>
    %241 = arith.addf %238, %240 : vector<8x16xf32>
    %242 = vector.extract_strided_slice %10 {offsets = [0, 32], sizes = [1, 16], strides = [1, 1]} : vector<1x48xf32> to vector<1x16xf32>
    %243 = vector.extract_strided_slice %11 {offsets = [0, 32], sizes = [1, 16], strides = [1, 1]} : vector<1x48xf32> to vector<1x16xf32>
    %cst_88 = arith.constant dense<0.000000e+00> : vector<8xf32>
    %244 = vector.multi_reduction <add>, %241, %cst_88 [1] : vector<8x16xf32> to vector<8xf32>
    %245 = vector.shape_cast %244 : vector<8xf32> to vector<8x1xf32>
    %cst_89 = arith.constant 1.600000e+01 : f32
    %246 = vector.broadcast %cst_89 : f32 to vector<8x1xf32>
    %247 = arith.divf %245, %246 : vector<8x1xf32>
    %248 = vector.broadcast %247 : vector<8x1xf32> to vector<8x16xf32>
    %249 = arith.subf %241, %248 : vector<8x16xf32>
    %250 = arith.mulf %249, %249 : vector<8x16xf32>
    %cst_90 = arith.constant dense<0.000000e+00> : vector<8xf32>
    %251 = vector.multi_reduction <add>, %250, %cst_90 [1] : vector<8x16xf32> to vector<8xf32>
    %252 = vector.shape_cast %251 : vector<8xf32> to vector<8x1xf32>
    %cst_91 = arith.constant 1.600000e+01 : f32
    %253 = vector.broadcast %cst_91 : f32 to vector<8x1xf32>
    %254 = arith.divf %252, %253 : vector<8x1xf32>
    %cst_92 = arith.constant 9.99999974E-6 : f32
    %255 = vector.broadcast %cst_92 : f32 to vector<8x1xf32>
    %256 = arith.addf %254, %255 : vector<8x1xf32>
    %257 = math.rsqrt %256 : vector<8x1xf32>
    %258 = vector.broadcast %257 : vector<8x1xf32> to vector<8x16xf32>
    %259 = arith.mulf %249, %258 : vector<8x16xf32>
    %260 = vector.broadcast %242 : vector<1x16xf32> to vector<8x16xf32>
    %261 = arith.mulf %259, %260 : vector<8x16xf32>
    %262 = vector.broadcast %243 : vector<1x16xf32> to vector<8x16xf32>
    %263 = arith.addf %261, %262 : vector<8x16xf32>
    %cst_93 = arith.constant 0.000000e+00 : f32
    %264 = vector.broadcast %cst_93 : f32 to vector<8x16xf32>
    %265 = arith.cmpf oge, %263, %264 : vector<8x16xf32>
    %cst_94 = arith.constant 0.00999999977 : f32
    %266 = vector.broadcast %cst_94 : f32 to vector<8x16xf32>
    %267 = arith.mulf %266, %263 : vector<8x16xf32>
    %268 = arith.select %265, %263, %267 : vector<8x16xi1>, vector<8x16xf32>
    %269 = arith.truncf %268 : vector<8x16xf32> to vector<8x16xbf16>
    %c2_95 = arith.constant 2 : index
    %c0_96 = arith.constant 0 : index
    %c0_97 = arith.constant 0 : index
    %270 = vector.load %arg10[%c2_95, %c0_96, %c0_97] : memref<3x16x16xbf16, #tpu.memory_space<vmem>>, vector<1x16x16xbf16>
    %271 = vector.shape_cast %270 : vector<1x16x16xbf16> to vector<16x16xbf16>
    %cst_98 = arith.constant dense<0.000000e+00> : vector<8x16xf32>
    %272 = tpu.matmul %269, %271, %cst_98 {dimension_numbers = #tpu.dot_dimension_numbers<[1], [0], [0], [1], [0, 0, 1, 1], [], []>} : vector<8x16xbf16>, vector<16x16xbf16>, vector<8x16xf32> -> vector<8x16xf32>
    %273 = vector.extract_strided_slice %12 {offsets = [0, 32], sizes = [1, 16], strides = [1, 1]} : vector<1x48xf32> to vector<1x16xf32>
    %274 = vector.broadcast %273 : vector<1x16xf32> to vector<8x16xf32>
    %275 = arith.addf %272, %274 : vector<8x16xf32>
    %276 = vector.extract_strided_slice %13 {offsets = [0, 32], sizes = [1, 16], strides = [1, 1]} : vector<1x48xf32> to vector<1x16xf32>
    %277 = vector.extract_strided_slice %14 {offsets = [0, 32], sizes = [1, 16], strides = [1, 1]} : vector<1x48xf32> to vector<1x16xf32>
    %cst_99 = arith.constant dense<0.000000e+00> : vector<8xf32>
    %278 = vector.multi_reduction <add>, %275, %cst_99 [1] : vector<8x16xf32> to vector<8xf32>
    %279 = vector.shape_cast %278 : vector<8xf32> to vector<8x1xf32>
    %cst_100 = arith.constant 1.600000e+01 : f32
    %280 = vector.broadcast %cst_100 : f32 to vector<8x1xf32>
    %281 = arith.divf %279, %280 : vector<8x1xf32>
    %282 = vector.broadcast %281 : vector<8x1xf32> to vector<8x16xf32>
    %283 = arith.subf %275, %282 : vector<8x16xf32>
    %284 = arith.mulf %283, %283 : vector<8x16xf32>
    %cst_101 = arith.constant dense<0.000000e+00> : vector<8xf32>
    %285 = vector.multi_reduction <add>, %284, %cst_101 [1] : vector<8x16xf32> to vector<8xf32>
    %286 = vector.shape_cast %285 : vector<8xf32> to vector<8x1xf32>
    %cst_102 = arith.constant 1.600000e+01 : f32
    %287 = vector.broadcast %cst_102 : f32 to vector<8x1xf32>
    %288 = arith.divf %286, %287 : vector<8x1xf32>
    %cst_103 = arith.constant 9.99999974E-6 : f32
    %289 = vector.broadcast %cst_103 : f32 to vector<8x1xf32>
    %290 = arith.addf %288, %289 : vector<8x1xf32>
    %291 = math.rsqrt %290 : vector<8x1xf32>
    %292 = vector.broadcast %291 : vector<8x1xf32> to vector<8x16xf32>
    %293 = arith.mulf %283, %292 : vector<8x16xf32>
    %294 = vector.broadcast %276 : vector<1x16xf32> to vector<8x16xf32>
    %295 = arith.mulf %293, %294 : vector<8x16xf32>
    %296 = vector.broadcast %277 : vector<1x16xf32> to vector<8x16xf32>
    %297 = arith.addf %295, %296 : vector<8x16xf32>
    %cst_104 = arith.constant 0.000000e+00 : f32
    %298 = vector.broadcast %cst_104 : f32 to vector<8x16xf32>
    %299 = arith.cmpf oge, %297, %298 : vector<8x16xf32>
    %cst_105 = arith.constant 0.00999999977 : f32
    %300 = vector.broadcast %cst_105 : f32 to vector<8x16xf32>
    %301 = arith.mulf %300, %297 : vector<8x16xf32>
    %302 = arith.select %299, %297, %301 : vector<8x16xi1>, vector<8x16xf32>
    %303 = tpu.concatenate %110, %206, %302 in 1 : vector<8x16xf32>, vector<8x16xf32>, vector<8x16xf32> -> vector<8x48xf32>
    %c0_106 = arith.constant 0 : index
    %c0_107 = arith.constant 0 : index
    %304 = vector.load %arg14[%c0_106, %c0_107] : memref<8x48xf32, #tpu.memory_space<vmem>>, vector<8x48xf32>
    tpu.vector_store %arg14[%c0_106, %c0_107], %303 {strides = array<i32>} : memref<8x48xf32, #tpu.memory_space<vmem>>, vector<8x48xf32>,
    return
  }
  func.func @transform_0(%arg0: i32) -> (i32, i32) {
    %c0_i32 = arith.constant 0 : i32
    %c0_i32_0 = arith.constant 0 : i32
    return %arg0, %c0_i32 : i32, i32
  }
  func.func @transform_1(%arg0: i32) -> (i32, i32) {
    %c0_i32 = arith.constant 0 : i32
    %c0_i32_0 = arith.constant 0 : i32
    %c0_i32_1 = arith.constant 0 : i32
    return %c0_i32, %c0_i32_0 : i32, i32
  }
  func.func @transform_2(%arg0: i32) -> (i32, i32) {
    %c0_i32 = arith.constant 0 : i32
    %c0_i32_0 = arith.constant 0 : i32
    %c0_i32_1 = arith.constant 0 : i32
    return %c0_i32, %c0_i32_0 : i32, i32
  }
  func.func @transform_3(%arg0: i32) -> (i32, i32) {
    %c0_i32 = arith.constant 0 : i32
    %c0_i32_0 = arith.constant 0 : i32
    %c0_i32_1 = arith.constant 0 : i32
    return %c0_i32, %c0_i32_0 : i32, i32
  }
  func.func @transform_4(%arg0: i32) -> (i32, i32) {
    %c0_i32 = arith.constant 0 : i32
    %c0_i32_0 = arith.constant 0 : i32
    %c0_i32_1 = arith.constant 0 : i32
    return %c0_i32, %c0_i32_0 : i32, i32
  }
  func.func @transform_5(%arg0: i32) -> (i32, i32, i32) {
    %c0_i32 = arith.constant 0 : i32
    %c0_i32_0 = arith.constant 0 : i32
    %c0_i32_1 = arith.constant 0 : i32
    %c0_i32_2 = arith.constant 0 : i32
    return %c0_i32, %c0_i32_0, %c0_i32_1 : i32, i32, i32
  }
  func.func @transform_6(%arg0: i32) -> (i32, i32) {
    %c0_i32 = arith.constant 0 : i32
    %c0_i32_0 = arith.constant 0 : i32
    %c0_i32_1 = arith.constant 0 : i32
    return %c0_i32, %c0_i32_0 : i32, i32
  }
  func.func @transform_7(%arg0: i32) -> (i32, i32) {
    %c0_i32 = arith.constant 0 : i32
    %c0_i32_0 = arith.constant 0 : i32
    %c0_i32_1 = arith.constant 0 : i32
    return %c0_i32, %c0_i32_0 : i32, i32
  }
  func.func @transform_8(%arg0: i32) -> (i32, i32) {
    %c0_i32 = arith.constant 0 : i32
    %c0_i32_0 = arith.constant 0 : i32
    %c0_i32_1 = arith.constant 0 : i32
    return %c0_i32, %c0_i32_0 : i32, i32
  }
  func.func @transform_9(%arg0: i32) -> (i32, i32, i32) {
    %c0_i32 = arith.constant 0 : i32
    %c0_i32_0 = arith.constant 0 : i32
    %c0_i32_1 = arith.constant 0 : i32
    %c0_i32_2 = arith.constant 0 : i32
    return %c0_i32, %c0_i32_0, %c0_i32_1 : i32, i32, i32
  }
  func.func @transform_10(%arg0: i32) -> (i32, i32) {
    %c0_i32 = arith.constant 0 : i32
    %c0_i32_0 = arith.constant 0 : i32
    %c0_i32_1 = arith.constant 0 : i32
    return %c0_i32, %c0_i32_0 : i32, i32
  }
  func.func @transform_11(%arg0: i32) -> (i32, i32) {
    %c0_i32 = arith.constant 0 : i32
    %c0_i32_0 = arith.constant 0 : i32
    %c0_i32_1 = arith.constant 0 : i32
    return %c0_i32, %c0_i32_0 : i32, i32
  }
  func.func @transform_12(%arg0: i32) -> (i32, i32) {
    %c0_i32 = arith.constant 0 : i32
    %c0_i32_0 = arith.constant 0 : i32
    %c0_i32_1 = arith.constant 0 : i32
    return %c0_i32, %c0_i32_0 : i32, i32
  }
  func.func @transform_13(%arg0: i32) -> (i32, i32) {
    %c0_i32 = arith.constant 0 : i32
    %c0_i32_0 = arith.constant 0 : i32
    return %arg0, %c0_i32 : i32, i32
  }
}

</mosaic_0001>

<llo_original>
// kernel: tpu_custom_call.1
$region0: #{tpu_custom_call.1}
  #allocation0 [shape = 'u32[]', space=smem, size = 0x4, offset = 0x4, fixed_abs, tag = 'smem constant byte address 0x4 - core index']
  #allocation1 [shape = 'u32[144,128]{1,0:T(1,128)}', space=vmem, size = 0x12000, scoped, tag = 'internal scratch']
  %s0 = inlined_call_operand.vmem [shape: f32[32,18], index: 0, kind: input, shape index: {}]
  %s1 = inlined_call_operand.hbm [shape: bf16[18,48], index: 1, kind: input, shape index: {}]
  %s2 = inlined_call_operand.vmem [shape: f32[1,48], index: 2, kind: input, shape index: {}]
  %s3 = inlined_call_operand.vmem [shape: f32[1,48], index: 3, kind: input, shape index: {}]
  %s4 = inlined_call_operand.vmem [shape: f32[1,48], index: 4, kind: input, shape index: {}]
  %s5 = inlined_call_operand.vmem [shape: bf16[3,16,16], index: 5, kind: input, shape index: {}]
  %s6 = inlined_call_operand.vmem [shape: f32[1,48], index: 6, kind: input, shape index: {}]
  %s7 = inlined_call_operand.vmem [shape: f32[1,48], index: 7, kind: input, shape index: {}]
  %s8 = inlined_call_operand.vmem [shape: f32[1,48], index: 8, kind: input, shape index: {}]
  %s9 = inlined_call_operand.vmem [shape: bf16[3,16,16], index: 9, kind: input, shape index: {}]
  %s10 = inlined_call_operand.vmem [shape: f32[1,48], index: 10, kind: input, shape index: {}]
  %s11 = inlined_call_operand.vmem [shape: f32[1,48], index: 11, kind: input, shape index: {}]
  %s12 = inlined_call_operand.vmem [shape: f32[1,48], index: 12, kind: input, shape index: {}]
  %s13 = inlined_call_operand.hbm [shape: f32[32,48], index: 13, kind: output, shape index: {}]
  %s14 = sld [smem:[#allocation0]]
  $region89: #{tpu_custom_call.1} parent=0
    _
  %s16 = ssub.s32 1, %s14
  %s17 = scalar_select 0, %s16, %s14
  $region1: #{tpu_custom_call.1} parent=0
    #allocation2 [shape = 'u8[6144]{0}', space=vmem, size = 0x1800, scoped, tag = 'input window, operand 1, single buffered']
    #allocation3 [shape = 's32[2]{0}', space=sflag, size = 0x8, scoped, tag = 'scoped memory for tpu_custom_call.1']
    #allocation4 [shape = 's32[2]{0}', space=sflag, size = 0x8, scoped, tag = 'scoped memory for tpu_custom_call.1']
    #allocation5 [shape = 'u8[8192]{0}', space=vmem, size = 0x2000, scoped, tag = 'output window, operand 0']
    %18 = vsyncpa [#allocation3], 0
    %19 = vsyncpa [#allocation4], 0
    %s20 = scalar_lea.sflag [#allocation4], 1
    %21 = vsyncpa %s20, 0
    loop: start=0, step=1, limit=6
    $region2: #{tpu_custom_call.1} parent=1 // loop_pre_header
      _
    $region3: #{tpu_custom_call.1} parent=1 // loop_header
      %s23 = sphi 0, %s27
      %p24 = scmp.ge.s32.totalorder %s23, 6
      %s33 = sphi 0, %s35
      %s36 = sphi 0, %s33
      %s37 = sphi 0, %s36
      %s53 = sphi 0, %s37
      %s57 = sphi 0, %s57
      %s59 = sphi 0, %s57
      %s60 = sphi 0, %s59
      %s74 = sphi 0, %s60
      %s78 = sphi 0, %s78
      %s80 = sphi 0, %s78
      %s81 = sphi 0, %s80
      %s95 = sphi 0, %s81
      %s99 = sphi 0, %s99
      %s101 = sphi 0, %s99
      %s102 = sphi 0, %s101
      %s116 = sphi 0, %s102
      %s120 = sphi 0, %s120
      %s122 = sphi 0, %s120
      %s123 = sphi 0, %s122
      %s137 = sphi 0, %s123
      %s141 = sphi 0, %s141
      %s143 = sphi 0, %s141
      %s144 = sphi 0, %s143
      %s158 = sphi 0, %s144
      %s162 = sphi 0, %s162
      %s164 = sphi 0, %s162
      %s165 = sphi 0, %s164
      %s179 = sphi 0, %s165
      %s183 = sphi 0, %s183
      %s185 = sphi 0, %s183
      %s186 = sphi 0, %s185
      %s200 = sphi 0, %s186
      %s204 = sphi 0, %s204
      %s206 = sphi 0, %s204
      %s207 = sphi 0, %s206
      %s221 = sphi 0, %s207
      %s225 = sphi 0, %s225
      %s227 = sphi 0, %s225
      %s228 = sphi 0, %s227
      %s242 = sphi 0, %s228
      %s246 = sphi 0, %s246
      %s248 = sphi 0, %s246
      %s249 = sphi 0, %s248
      %s263 = sphi 0, %s249
      %s267 = sphi 0, %s267
      %s269 = sphi 0, %s267
      %s270 = sphi 0, %s269
      %s284 = sphi 0, %s270
      %s288 = sphi 0, %s288
      %s290 = sphi 0, %s288
      %s291 = sphi 0, %s290
      %s305 = sphi 0, %s291
      %s311 = sphi 0, %s313
      %s314 = sphi 0, %s311
      %s315 = sphi 0, %s314
      %s331 = sphi 0, %s315
    $region4: #{tpu_custom_call.1} parent=1 // loop_header_branch
      %26 = sbr.rel (%p24) target = $region8
    $region5: #{tpu_custom_call.1} parent=1 // loop_body
      %s28 = ssub.s32 %s23, 1
      %s29 = ssub.s32 %s23, 2
      %s30 = sadd.s32 %s23, 1
      %s31 = ssub.s32 %s23, %s30
      %p32 = scmp.eq.s32.totalorder %s31, 0
      %s34 = sadd.s32 %s33, 1
      %s35 = scalar_select %p32, %s33, %s34
      %p38 = pneg %p32
      %p39 = scmp.eq.s32.totalorder %s23, 3
      %p40 = por %p38, %p39
      %p41 = scmp.ne.s32.totalorder %s33, %s36
      %p42 = scmp.eq.s32.totalorder %s23, 0
      %p43 = por %p41, %p42
      %p44 = scmp.ne.s32.totalorder %s33, %s36
      %p45 = scmp.eq.s32.totalorder %s28, 3
      %p46 = por %p44, %p45
      %p47 = scmp.ne.s32.totalorder %s36, %s37
      %p48 = scmp.eq.s32.totalorder %s28, 0
      %p49 = por %p47, %p48
      %p50 = scmp.ne.s32.totalorder %s36, %s37
      %p51 = scmp.eq.s32.totalorder %s29, 3
      %p52 = por %p50, %p51
      %p54 = scmp.ne.s32.totalorder %s37, %s53
      %p55 = scmp.eq.s32.totalorder %s29, 0
      %p56 = por %p54, %p55
      %s58 = sadd.s32 %s57, 1
      %p61 = scmp.eq.s32.totalorder %s23, 3
      %p62 = scmp.ne.s32.totalorder %s57, %s59
      %p63 = scmp.eq.s32.totalorder %s23, 0
      %p64 = por %p62, %p63
      %p65 = scmp.ne.s32.totalorder %s57, %s59
      %p66 = scmp.eq.s32.totalorder %s28, 3
      %p67 = por %p65, %p66
      %p68 = scmp.ne.s32.totalorder %s59, %s60
      %p69 = scmp.eq.s32.totalorder %s28, 0
      %p70 = por %p68, %p69
      %p71 = scmp.ne.s32.totalorder %s59, %s60
      %p72 = scmp.eq.s32.totalorder %s29, 3
      %p73 = por %p71, %p72
      %p75 = scmp.ne.s32.totalorder %s60, %s74
      %p76 = scmp.eq.s32.totalorder %s29, 0
      %p77 = por %p75, %p76
      %s79 = sadd.s32 %s78, 1
      %p82 = scmp.eq.s32.totalorder %s23, 3
      %p83 = scmp.ne.s32.totalorder %s78, %s80
      %p84 = scmp.eq.s32.totalorder %s23, 0
      %p85 = por %p83, %p84
      %p86 = scmp.ne.s32.totalorder %s78, %s80
      %p87 = scmp.eq.s32.totalorder %s28, 3
      %p88 = por %p86, %p87
      %p89 = scmp.ne.s32.totalorder %s80, %s81
      %p90 = scmp.eq.s32.totalorder %s28, 0
      %p91 = por %p89, %p90
      %p92 = scmp.ne.s32.totalorder %s80, %s81
      %p93 = scmp.eq.s32.totalorder %s29, 3
      %p94 = por %p92, %p93
      %p96 = scmp.ne.s32.totalorder %s81, %s95
      %p97 = scmp.eq.s32.totalorder %s29, 0
      %p98 = por %p96, %p97
      %s100 = sadd.s32 %s99, 1
      %p103 = scmp.eq.s32.totalorder %s23, 3
      %p104 = scmp.ne.s32.totalorder %s99, %s101
      %p105 = scmp.eq.s32.totalorder %s23, 0
      %p106 = por %p104, %p105
      %p107 = scmp.ne.s32.totalorder %s99, %s101
      %p108 = scmp.eq.s32.totalorder %s28, 3
      %p109 = por %p107, %p108
      %p110 = scmp.ne.s32.totalorder %s101, %s102
      %p111 = scmp.eq.s32.totalorder %s28, 0
      %p112 = por %p110, %p111
      %p113 = scmp.ne.s32.totalorder %s101, %s102
      %p114 = scmp.eq.s32.totalorder %s29, 3
      %p115 = por %p113, %p114
      %p117 = scmp.ne.s32.totalorder %s102, %s116
      %p118 = scmp.eq.s32.totalorder %s29, 0
      %p119 = por %p117, %p118
      %s121 = sadd.s32 %s120, 1
      %p124 = scmp.eq.s32.totalorder %s23, 3
      %p125 = scmp.ne.s32.totalorder %s120, %s122
      %p126 = scmp.eq.s32.totalorder %s23, 0
      %p127 = por %p125, %p126
      %p128 = scmp.ne.s32.totalorder %s120, %s122
      %p129 = scmp.eq.s32.totalorder %s28, 3
      %p130 = por %p128, %p129
      %p131 = scmp.ne.s32.totalorder %s122, %s123
      %p132 = scmp.eq.s32.totalorder %s28, 0
      %p133 = por %p131, %p132
      %p134 = scmp.ne.s32.totalorder %s122, %s123
      %p135 = scmp.eq.s32.totalorder %s29, 3
      %p136 = por %p134, %p135
      %p138 = scmp.ne.s32.totalorder %s123, %s137
      %p139 = scmp.eq.s32.totalorder %s29, 0
      %p140 = por %p138, %p139
      %s142 = sadd.s32 %s141, 1
      %p145 = scmp.eq.s32.totalorder %s23, 3
      %p146 = scmp.ne.s32.totalorder %s141, %s143
      %p147 = scmp.eq.s32.totalorder %s23, 0
      %p148 = por %p146, %p147
      %p149 = scmp.ne.s32.totalorder %s141, %s143
      %p150 = scmp.eq.s32.totalorder %s28, 3
      %p151 = por %p149, %p150
      %p152 = scmp.ne.s32.totalorder %s143, %s144
      %p153 = scmp.eq.s32.totalorder %s28, 0
      %p154 = por %p152, %p153
      %p155 = scmp.ne.s32.totalorder %s143, %s144
      %p156 = scmp.eq.s32.totalorder %s29, 3
      %p157 = por %p155, %p156
      %p159 = scmp.ne.s32.totalorder %s144, %s158
      %p160 = scmp.eq.s32.totalorder %s29, 0
      %p161 = por %p159, %p160
      %s163 = sadd.s32 %s162, 1
      %p166 = scmp.eq.s32.totalorder %s23, 3
      %p167 = scmp.ne.s32.totalorder %s162, %s164
      %p168 = scmp.eq.s32.totalorder %s23, 0
      %p169 = por %p167, %p168
      %p170 = scmp.ne.s32.totalorder %s162, %s164
      %p171 = scmp.eq.s32.totalorder %s28, 3
      %p172 = por %p170, %p171
      %p173 = scmp.ne.s32.totalorder %s164, %s165
      %p174 = scmp.eq.s32.totalorder %s28, 0
      %p175 = por %p173, %p174
      %p176 = scmp.ne.s32.totalorder %s164, %s165
      %p177 = scmp.eq.s32.totalorder %s29, 3
      %p178 = por %p176, %p177
      %p180 = scmp.ne.s32.totalorder %s165, %s179
      %p181 = scmp.eq.s32.totalorder %s29, 0
      %p182 = por %p180, %p181
      %s184 = sadd.s32 %s183, 1
      %p187 = scmp.eq.s32.totalorder %s23, 3
      %p188 = scmp.ne.s32.totalorder %s183, %s185
      %p189 = scmp.eq.s32.totalorder %s23, 0
      %p190 = por %p188, %p189
      %p191 = scmp.ne.s32.totalorder %s183, %s185
      %p192 = scmp.eq.s32.totalorder %s28, 3
      %p193 = por %p191, %p192
      %p194 = scmp.ne.s32.totalorder %s185, %s186
      %p195 = scmp.eq.s32.totalorder %s28, 0
      %p196 = por %p194, %p195
      %p197 = scmp.ne.s32.totalorder %s185, %s186
      %p198 = scmp.eq.s32.totalorder %s29, 3
      %p199 = por %p197, %p198
      %p201 = scmp.ne.s32.totalorder %s186, %s200
      %p202 = scmp.eq.s32.totalorder %s29, 0
      %p203 = por %p201, %p202
      %s205 = sadd.s32 %s204, 1
      %p208 = scmp.eq.s32.totalorder %s23, 3
      %p209 = scmp.ne.s32.totalorder %s204, %s206
      %p210 = scmp.eq.s32.totalorder %s23, 0
      %p211 = por %p209, %p210
      %p212 = scmp.ne.s32.totalorder %s204, %s206
      %p213 = scmp.eq.s32.totalorder %s28, 3
      %p214 = por %p212, %p213
      %p215 = scmp.ne.s32.totalorder %s206, %s207
      %p216 = scmp.eq.s32.totalorder %s28, 0
      %p217 = por %p215, %p216
      %p218 = scmp.ne.s32.totalorder %s206, %s207
      %p219 = scmp.eq.s32.totalorder %s29, 3
      %p220 = por %p218, %p219
      %p222 = scmp.ne.s32.totalorder %s207, %s221
      %p223 = scmp.eq.s32.totalorder %s29, 0
      %p224 = por %p222, %p223
      %s226 = sadd.s32 %s225, 1
      %p229 = scmp.eq.s32.totalorder %s23, 3
      %p230 = scmp.ne.s32.totalorder %s225, %s227
      %p231 = scmp.eq.s32.totalorder %s23, 0
      %p232 = por %p230, %p231
      %p233 = scmp.ne.s32.totalorder %s225, %s227
      %p234 = scmp.eq.s32.totalorder %s28, 3
      %p235 = por %p233, %p234
      %p236 = scmp.ne.s32.totalorder %s227, %s228
      %p237 = scmp.eq.s32.totalorder %s28, 0
      %p238 = por %p236, %p237
      %p239 = scmp.ne.s32.totalorder %s227, %s228
      %p240 = scmp.eq.s32.totalorder %s29, 3
      %p241 = por %p239, %p240
      %p243 = scmp.ne.s32.totalorder %s228, %s242
      %p244 = scmp.eq.s32.totalorder %s29, 0
      %p245 = por %p243, %p244
      %s247 = sadd.s32 %s246, 1
      %p250 = scmp.eq.s32.totalorder %s23, 3
      %p251 = scmp.ne.s32.totalorder %s246, %s248
      %p252 = scmp.eq.s32.totalorder %s23, 0
      %p253 = por %p251, %p252
      %p254 = scmp.ne.s32.totalorder %s246, %s248
      %p255 = scmp.eq.s32.totalorder %s28, 3
      %p256 = por %p254, %p255
      %p257 = scmp.ne.s32.totalorder %s248, %s249
      %p258 = scmp.eq.s32.totalorder %s28, 0
      %p259 = por %p257, %p258
      %p260 = scmp.ne.s32.totalorder %s248, %s249
      %p261 = scmp.eq.s32.totalorder %s29, 3
      %p262 = por %p260, %p261
      %p264 = scmp.ne.s32.totalorder %s249, %s263
      %p265 = scmp.eq.s32.totalorder %s29, 0
      %p266 = por %p264, %p265
      %s268 = sadd.s32 %s267, 1
      %p271 = scmp.eq.s32.totalorder %s23, 3
      %p272 = scmp.ne.s32.totalorder %s267, %s269
      %p273 = scmp.eq.s32.totalorder %s23, 0
      %p274 = por %p272, %p273
      %p275 = scmp.ne.s32.totalorder %s267, %s269
      %p276 = scmp.eq.s32.totalorder %s28, 3
      %p277 = por %p275, %p276
      %p278 = scmp.ne.s32.totalorder %s269, %s270
      %p279 = scmp.eq.s32.totalorder %s28, 0
      %p280 = por %p278, %p279
      %p281 = scmp.ne.s32.totalorder %s269, %s270
      %p282 = scmp.eq.s32.totalorder %s29, 3
      %p283 = por %p281, %p282
      %p285 = scmp.ne.s32.totalorder %s270, %s284
      %p286 = scmp.eq.s32.totalorder %s29, 0
      %p287 = por %p285, %p286
      %s289 = sadd.s32 %s288, 1
      %p292 = scmp.eq.s32.totalorder %s23, 3
      %p293 = scmp.ne.s32.totalorder %s288, %s290
      %p294 = scmp.eq.s32.totalorder %s23, 0
      %p295 = por %p293, %p294
      %p296 = scmp.ne.s32.totalorder %s288, %s290
      %p297 = scmp.eq.s32.totalorder %s28, 3
      %p298 = por %p296, %p297
      %p299 = scmp.ne.s32.totalorder %s290, %s291
      %p300 = scmp.eq.s32.totalorder %s28, 0
      %p301 = por %p299, %p300
      %p302 = scmp.ne.s32.totalorder %s290, %s291
      %p303 = scmp.eq.s32.totalorder %s29, 3
      %p304 = por %p302, %p303
      %p306 = scmp.ne.s32.totalorder %s291, %s305
      %p307 = scmp.eq.s32.totalorder %s29, 0
      %p308 = por %p306, %p307
      %s309 = ssub.s32 %s23, %s30
      %p310 = scmp.eq.s32.totalorder %s309, 0
      %s312 = sadd.s32 %s311, 1
      %s313 = scalar_select %p310, %s311, %s312
      %p316 = pneg %p310
      %p317 = scmp.eq.s32.totalorder %s23, 3
      %p318 = por %p316, %p317
      %p319 = scmp.ne.s32.totalorder %s311, %s314
      %p320 = scmp.eq.s32.totalorder %s23, 0
      %p321 = por %p319, %p320
      %p322 = scmp.ne.s32.totalorder %s311, %s314
      %p323 = scmp.eq.s32.totalorder %s28, 3
      %p324 = por %p322, %p323
      %p325 = scmp.ne.s32.totalorder %s314, %s315
      %p326 = scmp.eq.s32.totalorder %s28, 0
      %p327 = por %p325, %p326
      %p328 = scmp.ne.s32.totalorder %s314, %s315
      %p329 = scmp.eq.s32.totalorder %s29, 3
      %p330 = por %p328, %p329
      %p332 = scmp.ne.s32.totalorder %s315, %s331
      %p333 = scmp.eq.s32.totalorder %s29, 0
      %p334 = por %p332, %p333
      %p335 = scmp.le.s32.totalorder 1, %s23
      %p336 = scmp.lt.s32.totalorder %s23, 5
      %p337 = pnand %p335, %p336
      %p338 = pneg %p337
      // Predicated region
      $region9: #{tpu_custom_call.1} parent=5 // pred_check
        _
      $region10: #{tpu_custom_call.1} parent=5 // pred_check_branch
        %340 = sbr.rel (%p337) target = $region12
      $region11: #{tpu_custom_call.1} parent=5 // pred_region
        %s341 = ssub.s32 %s23, 1
        // Predicated region
        $region13: #{tpu_custom_call.1} parent=11 // pred_check
          %p342 = pneg %p70
        $region14: #{tpu_custom_call.1} parent=11 // pred_check_branch
          %344 = sbr.rel (%p342) target = $region16
        $region15: #{tpu_custom_call.1} parent=11 // pred_region
          %s346 = ssub.s32 192, 192
          %347 = vsyncadd [#allocation3], %s346
          %s348 = sshll.u32 [#allocation2], 4
          %s349 = int_to_ptr.vmem [resolvable:$true] %s348
          %354 = dma.hbm_to_vmem [thread:$0]  %s1, 192, %s349, [#allocation3], 64, 64, 4
        $region16: #{tpu_custom_call.1} parent=11 // pred_fallthru
          _
        // Predicated region
        $region17: #{tpu_custom_call.1} parent=11 // pred_check
          %p355 = pneg %p91
        $region18: #{tpu_custom_call.1} parent=11 // pred_check_branch
          %357 = sbr.rel (%p355) target = $region20
        $region19: #{tpu_custom_call.1} parent=11 // pred_region
          _
        $region20: #{tpu_custom_call.1} parent=11 // pred_fallthru
          _
        // Predicated region
        $region21: #{tpu_custom_call.1} parent=11 // pred_check
          %p358 = pneg %p112
        $region22: #{tpu_custom_call.1} parent=11 // pred_check_branch
          %360 = sbr.rel (%p358) target = $region24
        $region23: #{tpu_custom_call.1} parent=11 // pred_region
          _
        $region24: #{tpu_custom_call.1} parent=11 // pred_fallthru
          _
        // Predicated region
        $region25: #{tpu_custom_call.1} parent=11 // pred_check
          %p361 = pneg %p133
        $region26: #{tpu_custom_call.1} parent=11 // pred_check_branch
          %363 = sbr.rel (%p361) target = $region28
        $region27: #{tpu_custom_call.1} parent=11 // pred_region
          _
        $region28: #{tpu_custom_call.1} parent=11 // pred_fallthru
          _
        // Predicated region
        $region29: #{tpu_custom_call.1} parent=11 // pred_check
          %p364 = pneg %p154
        $region30: #{tpu_custom_call.1} parent=11 // pred_check_branch
          %366 = sbr.rel (%p364) target = $region32
        $region31: #{tpu_custom_call.1} parent=11 // pred_region
          _
        $region32: #{tpu_custom_call.1} parent=11 // pred_fallthru
          _
        // Predicated region
        $region33: #{tpu_custom_call.1} parent=11 // pred_check
          %p367 = pneg %p175
        $region34: #{tpu_custom_call.1} parent=11 // pred_check_branch
          %369 = sbr.rel (%p367) target = $region36
        $region35: #{tpu_custom_call.1} parent=11 // pred_region
          _
        $region36: #{tpu_custom_call.1} parent=11 // pred_fallthru
          _
        // Predicated region
        $region37: #{tpu_custom_call.1} parent=11 // pred_check
          %p370 = pneg %p196
        $region38: #{tpu_custom_call.1} parent=11 // pred_check_branch
          %372 = sbr.rel (%p370) target = $region40
        $region39: #{tpu_custom_call.1} parent=11 // pred_region
          _
        $region40: #{tpu_custom_call.1} parent=11 // pred_fallthru
          _
        // Predicated region
        $region41: #{tpu_custom_call.1} parent=11 // pred_check
          %p373 = pneg %p217
        $region42: #{tpu_custom_call.1} parent=11 // pred_check_branch
          %375 = sbr.rel (%p373) target = $region44
        $region43: #{tpu_custom_call.1} parent=11 // pred_region
          _
        $region44: #{tpu_custom_call.1} parent=11 // pred_fallthru
          _
        // Predicated region
        $region45: #{tpu_custom_call.1} parent=11 // pred_check
          %p376 = pneg %p238
        $region46: #{tpu_custom_call.1} parent=11 // pred_check_branch
          %378 = sbr.rel (%p376) target = $region48
        $region47: #{tpu_custom_call.1} parent=11 // pred_region
          _
        $region48: #{tpu_custom_call.1} parent=11 // pred_fallthru
          _
        // Predicated region
        $region49: #{tpu_custom_call.1} parent=11 // pred_check
          %p379 = pneg %p259
        $region50: #{tpu_custom_call.1} parent=11 // pred_check_branch
          %381 = sbr.rel (%p379) target = $region52
        $region51: #{tpu_custom_call.1} parent=11 // pred_region
          _
        $region52: #{tpu_custom_call.1} parent=11 // pred_fallthru
          _
        // Predicated region
        $region53: #{tpu_custom_call.1} parent=11 // pred_check
          %p382 = pneg %p280
        $region54: #{tpu_custom_call.1} parent=11 // pred_check_branch
          %384 = sbr.rel (%p382) target = $region56
        $region55: #{tpu_custom_call.1} parent=11 // pred_region
          _
        $region56: #{tpu_custom_call.1} parent=11 // pred_fallthru
          _
        // Predicated region
        $region57: #{tpu_custom_call.1} parent=11 // pred_check
          %p385 = pneg %p301
        $region58: #{tpu_custom_call.1} parent=11 // pred_check_branch
          %387 = sbr.rel (%p385) target = $region60
        $region59: #{tpu_custom_call.1} parent=11 // pred_region
          _
        $region60: #{tpu_custom_call.1} parent=11 // pred_fallthru
          _
      $region12: #{tpu_custom_call.1} parent=5 // pred_fallthru
        _
      %p388 = scmp.lt.s32.totalorder %s23, 4
      // Predicated region
      $region61: #{tpu_custom_call.1} parent=5 // pred_check
        %p389 = pneg %p388
      $region62: #{tpu_custom_call.1} parent=5 // pred_check_branch
        %391 = sbr.rel (%p389) target = $region64
      $region63: #{tpu_custom_call.1} parent=5 // pred_region
        // Predicated region
        $region65: #{tpu_custom_call.1} parent=63 // pred_check
          %p392 = pneg %p43
        $region66: #{tpu_custom_call.1} parent=63 // pred_check_branch
          %394 = sbr.rel (%p392) target = $region68
        $region67: #{tpu_custom_call.1} parent=63 // pred_region
          %p395 = scmp.lt.s32.totalorder %s23, 3
          %s396 = scalar_select %p395, %s23, 3
          %s397 = smul.addr %s396, 8
          %s398 = scalar_lea.vmem %s0, %s397
        $region68: #{tpu_custom_call.1} parent=63 // pred_fallthru
          _
      $region64: #{tpu_custom_call.1} parent=5 // pred_fallthru
        _
      %p399 = scmp.le.s32.totalorder 1, %s23
      %p400 = scmp.lt.s32.totalorder %s23, 5
      %p401 = pnand %p399, %p400
      %p402 = pneg %p401
      // Predicated region
      $region69: #{tpu_custom_call.1} parent=5 // pred_check
        _
      $region70: #{tpu_custom_call.1} parent=5 // pred_check_branch
        %404 = sbr.rel (%p401) target = $region72
      $region71: #{tpu_custom_call.1} parent=5 // pred_region
        %s405 = ssub.s32 %s23, 1
        // Predicated region
        $region73: #{tpu_custom_call.1} parent=71 // pred_check
          %p406 = pneg %p70
        $region74: #{tpu_custom_call.1} parent=71 // pred_check_branch
          %408 = sbr.rel (%p406) target = $region76
        $region75: #{tpu_custom_call.1} parent=71 // pred_region
          %409 = dma.done [#allocation3], 192
        $region76: #{tpu_custom_call.1} parent=71 // pred_fallthru
          _
        %p410 = scmp.lt.s32.totalorder %s28, 3
        %s411 = scalar_select %p410, %s28, 3
        %s412 = smul.addr %s411, 8
        %s413 = scalar_lea.vmem %s0, %s412
        %p414 = pneg %p49
        %p415 = pneg %p46
        %p416 = pneg %p70
        %p417 = pneg %p67
        %p418 = pneg %p91
        %p419 = pneg %p88
        %p420 = pneg %p112
        %p421 = pneg %p109
        %p422 = pneg %p133
        %p423 = pneg %p130
        %p424 = pneg %p154
        %p425 = pneg %p151
        %p426 = pneg %p175
        %p427 = pneg %p172
        %p428 = pneg %p196
        %p429 = pneg %p193
        %p430 = pneg %p217
        %p431 = pneg %p214
        %p432 = pneg %p238
        %p433 = pneg %p235
        %p434 = pneg %p259
        %p435 = pneg %p256
        %p436 = pneg %p280
        %p437 = pneg %p277
        %p438 = pneg %p301
        %p439 = pneg %p298
        %p440 = pneg %p327
        %p441 = pneg %p324
        %s442 = sand.u32 %s314, 1
        %s443 = scalar_lea.sflag [#allocation4], %s442
        %s444 = sand.u32 %s314, 1
        %s445 = smul.addr %s444, 8
        %s446 = scalar_lea.vmem [#allocation5], %s445
        %p447 = scmp.lt.s32.totalorder %s28, 3
        %s448 = scalar_select %p447, %s28, 3
        %s449 = smul.addr %s448, 8
        %s450 = scalar_lea.vmem %s0, %s449
        %v452 = vld [vmem:[%s450] sm:$0xff]
        %v453 = vpack.c.bf16 %v452, %v452
        %v454 = vld [vmem:[#allocation2] sm:$0xf]
        %v455 = vld [vmem:[#allocation2 + $0x4] sm:$0xf]
        %v456 = vld [vmem:[#allocation2 + $0x8] sm:$0x1]
        %v457 = vld [vmem:[%s2] sm:$0x1]
        %v459 = vlaneseq
        %v460 = vshrl.u32 %v459, 7
        %v461 = vsub.s32 0, %v460
        %v462 = vrot.slane %v457, %v461
        %v467 = vunpack.c.l.b16 %v454
        %v468 = vunpack.c.l.b16 %v455
        %v469 = vunpack.c.l.b16 %v456
        %v470 = vpack.c.b16 %v468, %v467
        %v471 = vpack.c.b16 %v469, %v469
        %vm473 = vcmask 146432
        %v475 = vsel %vm473, %v453, 0
        %vm477 = vcmask 1040384
        %v479 = vsel %vm477, %v471, 0
        %481 = vmatprep.subr.bf16.mxu0 0
        %482 = vmatpush1.bf16.msra.mxu0 %v470
        %483 = vmatprep.subr.bf16.mxu0 0
        %484 = vmatpush1.bf16.msra.mxu0 %v479
        %485 = vmatprep.subr.bf16.mxu0 0
        %486 = vmatpush1.bf16.msra.mxu0 0
        %487 = vmatprep.subr.bf16.mxu0 0
        %488 = vmatpush1.bf16.msra.mxu0 0
        %489 = vmatprep.subr.bf16.mxu0 0
        %490 = vmatpush1.bf16.msra.mxu0 0
        %491 = vmatprep.subr.bf16.mxu0 0
        %492 = vmatpush1.bf16.msra.mxu0 0
        %493 = vmatprep.subr.bf16.mxu0 0
        %494 = vmatpush1.bf16.msra.mxu0 0
        %495 = vmatprep.subr.bf16.mxu0 0
        %496 = vmatpush1.bf16.msra.mxu0 0
        %497 = vmatprep.subr.bf16.mxu0 0
        %498 = vmatpush1.bf16.msra.mxu0 0
        %499 = vmatprep.subr.bf16.mxu0 0
        %500 = vmatpush1.bf16.msra.mxu0 0
        %501 = vmatprep.subr.bf16.mxu0 0
        %502 = vmatpush1.bf16.msra.mxu0 0
        %503 = vmatprep.subr.bf16.mxu0 0
        %504 = vmatpush1.bf16.msra.mxu0 0
        %505 = vmatprep.subr.bf16.mxu0 0
        %506 = vmatpush1.bf16.msra.mxu0 0
        %507 = vmatprep.subr.bf16.mxu0 0
        %508 = vmatpush1.bf16.msra.mxu0 0
        %509 = vmatprep.subr.bf16.mxu0 0
        %510 = vmatpush1.bf16.msra.mxu0 0
        %511 = vmatprep.subr.bf16.mxu0 0
        %512 = vmatpush1.bf16.msra.mxu0 0
        %513 = vmatprep.mubr.bf16.mxu0 0
        %514 = vmatmul.mubr.bf16.gmra.mrb[0].mxu0 %v475
        %v515 = vpop.f32.mrb[0].mxu0
        %v516 = vadd.f32 %v462, %v515
        %v517 = vpop.f32.mrb[0].mxu0
        %v518 = vpop.f32.mrb[0].mxu0
        %v519 = vpop.f32.mrb[0].mxu0
        %520 = vdwg.mxu0
        %v521 = vld [vmem:[%s3] sm:$0x1]
        %v522 = vld [vmem:[%s4] sm:$0x1]
        %v523 = vld [vmem:[%s6] sm:$0x1]
        %v524 = vld [vmem:[%s7] sm:$0x1]
        %v525 = vld [vmem:[%s8] sm:$0x1]
        %v526 = vld [vmem:[%s10] sm:$0x1]
        %v527 = vld [vmem:[%s11] sm:$0x1]
        %v528 = vld [vmem:[%s12] sm:$0x1]
        %vm529 = vcmask 130048
        %v530 = vsel %vm529, %v516, 0.0
        %531 = vadd.xlane.f32.xlu0 %v530
        %v532 = vpop.xlane.xlu0 %531
        %v533 = vrcp.pop 16.0
        %v534 = vmul.f32 %v532, %v533
        %v535 = vsub.f32 %v516, %v534
        %v536 = vmul.f32 %v535, %v535
        %v537 = vsel %vm529, %v536, 0.0
        %538 = vadd.xlane.f32.xlu0 %v537
        %v539 = vpop.xlane.xlu0 %538
        %v540 = vmul.f32 %v539, %v533
        %v541 = vadd.f32 %v540, 1e-05
        %v542 = vrsqrt.pop %v541
        %v543 = vmul.f32 %v535, %v542
        %v545 = vlaneseq
        %v546 = vshrl.u32 %v545, 7
        %v547 = vsub.s32 0, %v546
        %v548 = vrot.slane %v521, %v547
        %v550 = vmul.f32 %v543, %v548
        %v552 = vlaneseq
        %v553 = vshrl.u32 %v552, 7
        %v554 = vsub.s32 0, %v553
        %v555 = vrot.slane %v522, %v554
        %v557 = vadd.f32 %v550, %v555
        %vm558 = vcmp.ge.f32.partialorder %v557, 0.0
        %v559 = vmul.f32 %v557, 0.01
        %v560 = vsel %vm558, %v557, %v559
        %v561 = vpack.c.bf16 %v560, %v560
        %v562 = vld [vmem:[%s5] sm:$0xf]
        %v563 = vld [vmem:[%s5 + $0x4] sm:$0xf]
        %v565 = vlaneseq
        %v566 = vshrl.u32 %v565, 7
        %v567 = vsub.s32 0, %v566
        %v568 = vrot.slane %v523, %v567
        %v572 = vunpack.c.l.b16 %v562
        %v573 = vunpack.c.l.b16 %v563
        %v574 = vpack.c.b16 %v573, %v572
        %v577 = vsel %vm529, %v561, 0
        %579 = vmatprep.subr.bf16.mxu0 0
        %580 = vmatpush1.bf16.msra.mxu0 %v574
        %581 = vmatprep.subr.bf16.mxu0 0
        %582 = vmatpush1.bf16.msra.mxu0 0
        %583 = vmatprep.subr.bf16.mxu0 0
        %584 = vmatpush1.bf16.msra.mxu0 0
        %585 = vmatprep.subr.bf16.mxu0 0
        %586 = vmatpush1.bf16.msra.mxu0 0
        %587 = vmatprep.subr.bf16.mxu0 0
        %588 = vmatpush1.bf16.msra.mxu0 0
        %589 = vmatprep.subr.bf16.mxu0 0
        %590 = vmatpush1.bf16.msra.mxu0 0
        %591 = vmatprep.subr.bf16.mxu0 0
        %592 = vmatpush1.bf16.msra.mxu0 0
        %593 = vmatprep.subr.bf16.mxu0 0
        %594 = vmatpush1.bf16.msra.mxu0 0
        %595 = vmatprep.subr.bf16.mxu0 0
        %596 = vmatpush1.bf16.msra.mxu0 0
        %597 = vmatprep.subr.bf16.mxu0 0
        %598 = vmatpush1.bf16.msra.mxu0 0
        %599 = vmatprep.subr.bf16.mxu0 0
        %600 = vmatpush1.bf16.msra.mxu0 0
        %601 = vmatprep.subr.bf16.mxu0 0
        %602 = vmatpush1.bf16.msra.mxu0 0
        %603 = vmatprep.subr.bf16.mxu0 0
        %604 = vmatpush1.bf16.msra.mxu0 0
        %605 = vmatprep.subr.bf16.mxu0 0
        %606 = vmatpush1.bf16.msra.mxu0 0
        %607 = vmatprep.subr.bf16.mxu0 0
        %608 = vmatpush1.bf16.msra.mxu0 0
        %609 = vmatprep.subr.bf16.mxu0 0
        %610 = vmatpush1.bf16.msra.mxu0 0
        %611 = vmatprep.mubr.bf16.mxu0 0
        %612 = vmatmul.mubr.bf16.gmra.mrb[0].mxu0 %v577
        %v613 = vpop.f32.mrb[0].mxu0
        %v614 = vadd.f32 %v568, %v613
        %v615 = vpop.f32.mrb[0].mxu0
        %v616 = vpop.f32.mrb[0].mxu0
        %v617 = vpop.f32.mrb[0].mxu0
        %618 = vdwg.mxu0
        %v619 = vsel %vm529, %v614, 0.0
        %620 = vadd.xlane.f32.xlu0 %v619
        %v621 = vpop.xlane.xlu0 %620
        %v622 = vmul.f32 %v621, %v533
        %v623 = vsub.f32 %v614, %v622
        %v624 = vmul.f32 %v623, %v623
        %v625 = vsel %vm529, %v624, 0.0
        %626 = vadd.xlane.f32.xlu0 %v625
        %v627 = vpop.xlane.xlu0 %626
        %v628 = vmul.f32 %v627, %v533
        %v629 = vadd.f32 %v628, 1e-05
        %v630 = vrsqrt.pop %v629
        %v631 = vmul.f32 %v623, %v630
        %v633 = vlaneseq
        %v634 = vshrl.u32 %v633, 7
        %v635 = vsub.s32 0, %v634
        %v636 = vrot.slane %v524, %v635
        %v638 = vmul.f32 %v631, %v636
        %v640 = vlaneseq
        %v641 = vshrl.u32 %v640, 7
        %v642 = vsub.s32 0, %v641
        %v643 = vrot.slane %v525, %v642
        %v645 = vadd.f32 %v638, %v643
        %vm646 = vcmp.ge.f32.partialorder %v645, 0.0
        %v647 = vmul.f32 %v645, 0.01
        %v648 = vsel %vm646, %v645, %v647
        %v649 = vpack.c.bf16 %v648, %v648
        %v650 = vld [vmem:[%s9] sm:$0xf]
        %v651 = vld [vmem:[%s9 + $0x4] sm:$0xf]
        %v653 = vlaneseq
        %v654 = vshrl.u32 %v653, 7
        %v655 = vsub.s32 0, %v654
        %v656 = vrot.slane %v526, %v655
        %v660 = vunpack.c.l.b16 %v650
        %v661 = vunpack.c.l.b16 %v651
        %v662 = vpack.c.b16 %v661, %v660
        %v665 = vsel %vm529, %v649, 0
        %667 = vmatprep.subr.bf16.mxu0 0
        %668 = vmatpush1.bf16.msra.mxu0 %v662
        %669 = vmatprep.subr.bf16.mxu0 0
        %670 = vmatpush1.bf16.msra.mxu0 0
        %671 = vmatprep.subr.bf16.mxu0 0
        %672 = vmatpush1.bf16.msra.mxu0 0
        %673 = vmatprep.subr.bf16.mxu0 0
        %674 = vmatpush1.bf16.msra.mxu0 0
        %675 = vmatprep.subr.bf16.mxu0 0
        %676 = vmatpush1.bf16.msra.mxu0 0
        %677 = vmatprep.subr.bf16.mxu0 0
        %678 = vmatpush1.bf16.msra.mxu0 0
        %679 = vmatprep.subr.bf16.mxu0 0
        %680 = vmatpush1.bf16.msra.mxu0 0
        %681 = vmatprep.subr.bf16.mxu0 0
        %682 = vmatpush1.bf16.msra.mxu0 0
        %683 = vmatprep.subr.bf16.mxu0 0
        %684 = vmatpush1.bf16.msra.mxu0 0
        %685 = vmatprep.subr.bf16.mxu0 0
        %686 = vmatpush1.bf16.msra.mxu0 0
        %687 = vmatprep.subr.bf16.mxu0 0
        %688 = vmatpush1.bf16.msra.mxu0 0
        %689 = vmatprep.subr.bf16.mxu0 0
        %690 = vmatpush1.bf16.msra.mxu0 0
        %691 = vmatprep.subr.bf16.mxu0 0
        %692 = vmatpush1.bf16.msra.mxu0 0
        %693 = vmatprep.subr.bf16.mxu0 0
        %694 = vmatpush1.bf16.msra.mxu0 0
        %695 = vmatprep.subr.bf16.mxu0 0
        %696 = vmatpush1.bf16.msra.mxu0 0
        %697 = vmatprep.subr.bf16.mxu0 0
        %698 = vmatpush1.bf16.msra.mxu0 0
        %699 = vmatprep.mubr.bf16.mxu0 0
        %700 = vmatmul.mubr.bf16.gmra.mrb[0].mxu0 %v665
        %v701 = vpop.f32.mrb[0].mxu0
        %v702 = vadd.f32 %v656, %v701
        %v703 = vpop.f32.mrb[0].mxu0
        %v704 = vpop.f32.mrb[0].mxu0
        %v705 = vpop.f32.mrb[0].mxu0
        %706 = vdwg.mxu0
        %v707 = vsel %vm529, %v702, 0.0
        %708 = vadd.xlane.f32.xlu0 %v707
        %v709 = vpop.xlane.xlu0 %708
        %v710 = vmul.f32 %v709, %v533
        %v711 = vsub.f32 %v702, %v710
        %v712 = vmul.f32 %v711, %v711
        %v713 = vsel %vm529, %v712, 0.0
        %714 = vadd.xlane.f32.xlu0 %v713
        %v715 = vpop.xlane.xlu0 %714
        %v716 = vmul.f32 %v715, %v533
        %v717 = vadd.f32 %v716, 1e-05
        %v718 = vrsqrt.pop %v717
        %v719 = vmul.f32 %v711, %v718
        %v721 = vlaneseq
        %v722 = vshrl.u32 %v721, 7
        %v723 = vsub.s32 0, %v722
        %v724 = vrot.slane %v527, %v723
        %v726 = vmul.f32 %v719, %v724
        %v728 = vlaneseq
        %v729 = vshrl.u32 %v728, 7
        %v730 = vsub.s32 0, %v729
        %v731 = vrot.slane %v528, %v730
        %v733 = vadd.f32 %v726, %v731
        %vm734 = vcmp.ge.f32.partialorder %v733, 0.0
        %v735 = vmul.f32 %v733, 0.01
        %v736 = vsel %vm734, %v733, %v735
        %738 = vrot.lane.b32.xlu0 %v516, 112
        %v739 = vpop.permute.xlu0 %738
        %v741 = vsel %vm529, %v739, 0.0
        %742 = vadd.xlane.f32.xlu0 %v741
        %v743 = vpop.xlane.xlu0 %742
        %v744 = vmul.f32 %v743, %v533
        %v745 = vsub.f32 %v516, %v744
        %v746 = vmul.f32 %v745, %v745
        %748 = vrot.lane.b32.xlu0 %v746, 112
        %v749 = vpop.permute.xlu0 %748
        %v751 = vsel %vm529, %v749, 0.0
        %752 = vadd.xlane.f32.xlu0 %v751
        %v753 = vpop.xlane.xlu0 %752
        %v754 = vmul.f32 %v753, %v533
        %v755 = vadd.f32 %v754, 1e-05
        %v756 = vrsqrt.pop %v755
        %v757 = vmul.f32 %v745, %v756
        %v758 = vmul.f32 %v757, %v548
        %v759 = vadd.f32 %v758, %v555
        %vm760 = vcmp.ge.f32.partialorder %v759, 0.0
        %v761 = vmul.f32 %v759, 0.01
        %v762 = vsel %vm760, %v759, %v761
        %v763 = vpack.c.bf16 %v762, %v762
        %s764 = scalar_lea.vmem %s5, 8
        %v765 = vld [vmem:[%s764] sm:$0xf]
        %v766 = vld [vmem:[%s764 + $0x4] sm:$0xf]
        %768 = vrot.lane.b32.xlu0 %v763, 112
        %v769 = vpop.permute.xlu0 %768
        %v772 = vunpack.c.l.b16 %v765
        %v773 = vunpack.c.l.b16 %v766
        %v774 = vpack.c.b16 %v773, %v772
        %776 = vrot.lane.b32.xlu0 %v568, 112
        %v777 = vpop.permute.xlu0 %776
        %v780 = vsel %vm529, %v769, 0
        %782 = vmatprep.subr.bf16.mxu0 0
        %783 = vmatpush1.bf16.msra.mxu0 %v774
        %784 = vmatprep.subr.bf16.mxu0 0
        %785 = vmatpush1.bf16.msra.mxu0 0
        %786 = vmatprep.subr.bf16.mxu0 0
        %787 = vmatpush1.bf16.msra.mxu0 0
        %788 = vmatprep.subr.bf16.mxu0 0
        %789 = vmatpush1.bf16.msra.mxu0 0
        %790 = vmatprep.subr.bf16.mxu0 0
        %791 = vmatpush1.bf16.msra.mxu0 0
        %792 = vmatprep.subr.bf16.mxu0 0
        %793 = vmatpush1.bf16.msra.mxu0 0
        %794 = vmatprep.subr.bf16.mxu0 0
        %795 = vmatpush1.bf16.msra.mxu0 0
        %796 = vmatprep.subr.bf16.mxu0 0
        %797 = vmatpush1.bf16.msra.mxu0 0
        %798 = vmatprep.subr.bf16.mxu0 0
        %799 = vmatpush1.bf16.msra.mxu0 0
        %800 = vmatprep.subr.bf16.mxu0 0
        %801 = vmatpush1.bf16.msra.mxu0 0
        %802 = vmatprep.subr.bf16.mxu0 0
        %803 = vmatpush1.bf16.msra.mxu0 0
        %804 = vmatprep.subr.bf16.mxu0 0
        %805 = vmatpush1.bf16.msra.mxu0 0
        %806 = vmatprep.subr.bf16.mxu0 0
        %807 = vmatpush1.bf16.msra.mxu0 0
        %808 = vmatprep.subr.bf16.mxu0 0
        %809 = vmatpush1.bf16.msra.mxu0 0
        %810 = vmatprep.subr.bf16.mxu0 0
        %811 = vmatpush1.bf16.msra.mxu0 0
        %812 = vmatprep.subr.bf16.mxu0 0
        %813 = vmatpush1.bf16.msra.mxu0 0
        %814 = vmatprep.mubr.bf16.mxu0 0
        %815 = vmatmul.mubr.bf16.gmra.mrb[0].mxu0 %v780
        %v816 = vpop.f32.mrb[0].mxu0
        %v817 = vadd.f32 %v777, %v816
        %v818 = vpop.f32.mrb[0].mxu0
        %v819 = vpop.f32.mrb[0].mxu0
        %v820 = vpop.f32.mrb[0].mxu0
        %821 = vdwg.mxu0
        %v822 = vsel %vm529, %v817, 0.0
        %823 = vadd.xlane.f32.xlu0 %v822
        %v824 = vpop.xlane.xlu0 %823
        %v825 = vmul.f32 %v824, %v533
        %v826 = vsub.f32 %v817, %v825
        %v827 = vmul.f32 %v826, %v826
        %v828 = vsel %vm529, %v827, 0.0
        %829 = vadd.xlane.f32.xlu0 %v828
        %v830 = vpop.xlane.xlu0 %829
        %v831 = vmul.f32 %v830, %v533
        %v832 = vadd.f32 %v831, 1e-05
        %v833 = vrsqrt.pop %v832
        %v834 = vmul.f32 %v826, %v833
        %835 = vrot.lane.b32.xlu0 %v636, 112
        %v836 = vpop.permute.xlu0 %835
        %v838 = vmul.f32 %v834, %v836
        %839 = vrot.lane.b32.xlu0 %v643, 112
        %v840 = vpop.permute.xlu0 %839
        %v842 = vadd.f32 %v838, %v840
        %vm843 = vcmp.ge.f32.partialorder %v842, 0.0
        %v844 = vmul.f32 %v842, 0.01
        %v845 = vsel %vm843, %v842, %v844
        %v846 = vpack.c.bf16 %v845, %v845
        %s847 = scalar_lea.vmem %s9, 8
        %v848 = vld [vmem:[%s847] sm:$0xf]
        %v849 = vld [vmem:[%s847 + $0x4] sm:$0xf]
        %v852 = vunpack.c.l.b16 %v848
        %v853 = vunpack.c.l.b16 %v849
        %v854 = vpack.c.b16 %v853, %v852
        %856 = vrot.lane.b32.xlu0 %v656, 112
        %v857 = vpop.permute.xlu0 %856
        %v860 = vsel %vm529, %v846, 0
        %862 = vmatprep.subr.bf16.mxu0 0
        %863 = vmatpush1.bf16.msra.mxu0 %v854
        %864 = vmatprep.subr.bf16.mxu0 0
        %865 = vmatpush1.bf16.msra.mxu0 0
        %866 = vmatprep.subr.bf16.mxu0 0
        %867 = vmatpush1.bf16.msra.mxu0 0
        %868 = vmatprep.subr.bf16.mxu0 0
        %869 = vmatpush1.bf16.msra.mxu0 0
        %870 = vmatprep.subr.bf16.mxu0 0
        %871 = vmatpush1.bf16.msra.mxu0 0
        %872 = vmatprep.subr.bf16.mxu0 0
        %873 = vmatpush1.bf16.msra.mxu0 0
        %874 = vmatprep.subr.bf16.mxu0 0
        %875 = vmatpush1.bf16.msra.mxu0 0
        %876 = vmatprep.subr.bf16.mxu0 0
        %877 = vmatpush1.bf16.msra.mxu0 0
        %878 = vmatprep.subr.bf16.mxu0 0
        %879 = vmatpush1.bf16.msra.mxu0 0
        %880 = vmatprep.subr.bf16.mxu0 0
        %881 = vmatpush1.bf16.msra.mxu0 0
        %882 = vmatprep.subr.bf16.mxu0 0
        %883 = vmatpush1.bf16.msra.mxu0 0
        %884 = vmatprep.subr.bf16.mxu0 0
        %885 = vmatpush1.bf16.msra.mxu0 0
        %886 = vmatprep.subr.bf16.mxu0 0
        %887 = vmatpush1.bf16.msra.mxu0 0
        %888 = vmatprep.subr.bf16.mxu0 0
        %889 = vmatpush1.bf16.msra.mxu0 0
        %890 = vmatprep.subr.bf16.mxu0 0
        %891 = vmatpush1.bf16.msra.mxu0 0
        %892 = vmatprep.subr.bf16.mxu0 0
        %893 = vmatpush1.bf16.msra.mxu0 0
        %894 = vmatprep.mubr.bf16.mxu0 0
        %895 = vmatmul.mubr.bf16.gmra.mrb[0].mxu0 %v860
        %v896 = vpop.f32.mrb[0].mxu0
        %v897 = vadd.f32 %v857, %v896
        %v898 = vpop.f32.mrb[0].mxu0
        %v899 = vpop.f32.mrb[0].mxu0
        %v900 = vpop.f32.mrb[0].mxu0
        %901 = vdwg.mxu0
        %v902 = vsel %vm529, %v897, 0.0
        %903 = vadd.xlane.f32.xlu0 %v902
        %v904 = vpop.xlane.xlu0 %903
        %v905 = vmul.f32 %v904, %v533
        %v906 = vsub.f32 %v897, %v905
        %v907 = vmul.f32 %v906, %v906
        %v908 = vsel %vm529, %v907, 0.0
        %909 = vadd.xlane.f32.xlu0 %v908
        %v910 = vpop.xlane.xlu0 %909
        %v911 = vmul.f32 %v910, %v533
        %v912 = vadd.f32 %v911, 1e-05
        %v913 = vrsqrt.pop %v912
        %v914 = vmul.f32 %v906, %v913
        %915 = vrot.lane.b32.xlu0 %v724, 112
        %v916 = vpop.permute.xlu0 %915
        %v918 = vmul.f32 %v914, %v916
        %919 = vrot.lane.b32.xlu0 %v731, 112
        %v920 = vpop.permute.xlu0 %919
        %v922 = vadd.f32 %v918, %v920
        %vm923 = vcmp.ge.f32.partialorder %v922, 0.0
        %v924 = vmul.f32 %v922, 0.01
        %v925 = vsel %vm923, %v922, %v924
        %926 = vrot.lane.b32.xlu0 %v516, 96
        %v927 = vpop.permute.xlu0 %926
        %v929 = vsel %vm529, %v927, 0.0
        %930 = vadd.xlane.f32.xlu0 %v929
        %v931 = vpop.xlane.xlu0 %930
        %v932 = vmul.f32 %v931, %v533
        %v933 = vsub.f32 %v516, %v932
        %v934 = vmul.f32 %v933, %v933
        %936 = vrot.lane.b32.xlu0 %v934, 96
        %v937 = vpop.permute.xlu0 %936
        %v939 = vsel %vm529, %v937, 0.0
        %940 = vadd.xlane.f32.xlu0 %v939
        %v941 = vpop.xlane.xlu0 %940
        %v942 = vmul.f32 %v941, %v533
        %v943 = vadd.f32 %v942, 1e-05
        %v944 = vrsqrt.pop %v943
        %v945 = vmul.f32 %v933, %v944
        %v946 = vmul.f32 %v945, %v548
        %v947 = vadd.f32 %v946, %v555
        %vm948 = vcmp.ge.f32.partialorder %v947, 0.0
        %v949 = vmul.f32 %v947, 0.01
        %v950 = vsel %vm948, %v947, %v949
        %v951 = vpack.c.bf16 %v950, %v950
        %s952 = scalar_lea.vmem %s5, 16
        %v953 = vld [vmem:[%s952] sm:$0xf]
        %v954 = vld [vmem:[%s952 + $0x4] sm:$0xf]
        %956 = vrot.lane.b32.xlu0 %v951, 96
        %v957 = vpop.permute.xlu0 %956
        %v960 = vunpack.c.l.b16 %v953
        %v961 = vunpack.c.l.b16 %v954
        %v962 = vpack.c.b16 %v961, %v960
        %964 = vrot.lane.b32.xlu0 %v568, 96
        %v965 = vpop.permute.xlu0 %964
        %v968 = vsel %vm529, %v957, 0
        %970 = vmatprep.subr.bf16.mxu0 0
        %971 = vmatpush1.bf16.msra.mxu0 %v962
        %972 = vmatprep.subr.bf16.mxu0 0
        %973 = vmatpush1.bf16.msra.mxu0 0
        %974 = vmatprep.subr.bf16.mxu0 0
        %975 = vmatpush1.bf16.msra.mxu0 0
        %976 = vmatprep.subr.bf16.mxu0 0
        %977 = vmatpush1.bf16.msra.mxu0 0
        %978 = vmatprep.subr.bf16.mxu0 0
        %979 = vmatpush1.bf16.msra.mxu0 0
        %980 = vmatprep.subr.bf16.mxu0 0
        %981 = vmatpush1.bf16.msra.mxu0 0
        %982 = vmatprep.subr.bf16.mxu0 0
        %983 = vmatpush1.bf16.msra.mxu0 0
        %984 = vmatprep.subr.bf16.mxu0 0
        %985 = vmatpush1.bf16.msra.mxu0 0
        %986 = vmatprep.subr.bf16.mxu0 0
        %987 = vmatpush1.bf16.msra.mxu0 0
        %988 = vmatprep.subr.bf16.mxu0 0
        %989 = vmatpush1.bf16.msra.mxu0 0
        %990 = vmatprep.subr.bf16.mxu0 0
        %991 = vmatpush1.bf16.msra.mxu0 0
        %992 = vmatprep.subr.bf16.mxu0 0
        %993 = vmatpush1.bf16.msra.mxu0 0
        %994 = vmatprep.subr.bf16.mxu0 0
        %995 = vmatpush1.bf16.msra.mxu0 0
        %996 = vmatprep.subr.bf16.mxu0 0
        %997 = vmatpush1.bf16.msra.mxu0 0
        %998 = vmatprep.subr.bf16.mxu0 0
        %999 = vmatpush1.bf16.msra.mxu0 0
        %1000 = vmatprep.subr.bf16.mxu0 0
        %1001 = vmatpush1.bf16.msra.mxu0 0
        %1002 = vmatprep.mubr.bf16.mxu0 0
        %1003 = vmatmul.mubr.bf16.gmra.mrb[0].mxu0 %v968
        %v1004 = vpop.f32.mrb[0].mxu0
        %v1005 = vadd.f32 %v965, %v1004
        %v1006 = vpop.f32.mrb[0].mxu0
        %v1007 = vpop.f32.mrb[0].mxu0
        %v1008 = vpop.f32.mrb[0].mxu0
        %1009 = vdwg.mxu0
        %v1010 = vsel %vm529, %v1005, 0.0
        %1011 = vadd.xlane.f32.xlu0 %v1010
        %v1012 = vpop.xlane.xlu0 %1011
        %v1013 = vmul.f32 %v1012, %v533
        %v1014 = vsub.f32 %v1005, %v1013
        %v1015 = vmul.f32 %v1014, %v1014
        %v1016 = vsel %vm529, %v1015, 0.0
        %1017 = vadd.xlane.f32.xlu0 %v1016
        %v1018 = vpop.xlane.xlu0 %1017
        %v1019 = vmul.f32 %v1018, %v533
        %v1020 = vadd.f32 %v1019, 1e-05
        %v1021 = vrsqrt.pop %v1020
        %v1022 = vmul.f32 %v1014, %v1021
        %1023 = vrot.lane.b32.xlu0 %v636, 96
        %v1024 = vpop.permute.xlu0 %1023
        %v1026 = vmul.f32 %v1022, %v1024
        %1027 = vrot.lane.b32.xlu0 %v643, 96
        %v1028 = vpop.permute.xlu0 %1027
        %v1030 = vadd.f32 %v1026, %v1028
        %vm1031 = vcmp.ge.f32.partialorder %v1030, 0.0
        %v1032 = vmul.f32 %v1030, 0.01
        %v1033 = vsel %vm1031, %v1030, %v1032
        %v1034 = vpack.c.bf16 %v1033, %v1033
        %s1035 = scalar_lea.vmem %s9, 16
        %v1036 = vld [vmem:[%s1035] sm:$0xf]
        %v1037 = vld [vmem:[%s1035 + $0x4] sm:$0xf]
        %v1040 = vunpack.c.l.b16 %v1036
        %v1041 = vunpack.c.l.b16 %v1037
        %v1042 = vpack.c.b16 %v1041, %v1040
        %1044 = vrot.lane.b32.xlu0 %v656, 96
        %v1045 = vpop.permute.xlu0 %1044
        %v1048 = vsel %vm529, %v1034, 0
        %1050 = vmatprep.subr.bf16.mxu0 0
        %1051 = vmatpush1.bf16.msra.mxu0 %v1042
        %1052 = vmatprep.subr.bf16.mxu0 0
        %1053 = vmatpush1.bf16.msra.mxu0 0
        %1054 = vmatprep.subr.bf16.mxu0 0
        %1055 = vmatpush1.bf16.msra.mxu0 0
        %1056 = vmatprep.subr.bf16.mxu0 0
        %1057 = vmatpush1.bf16.msra.mxu0 0
        %1058 = vmatprep.subr.bf16.mxu0 0
        %1059 = vmatpush1.bf16.msra.mxu0 0
        %1060 = vmatprep.subr.bf16.mxu0 0
        %1061 = vmatpush1.bf16.msra.mxu0 0
        %1062 = vmatprep.subr.bf16.mxu0 0
        %1063 = vmatpush1.bf16.msra.mxu0 0
        %1064 = vmatprep.subr.bf16.mxu0 0
        %1065 = vmatpush1.bf16.msra.mxu0 0
        %1066 = vmatprep.subr.bf16.mxu0 0
        %1067 = vmatpush1.bf16.msra.mxu0 0
        %1068 = vmatprep.subr.bf16.mxu0 0
        %1069 = vmatpush1.bf16.msra.mxu0 0
        %1070 = vmatprep.subr.bf16.mxu0 0
        %1071 = vmatpush1.bf16.msra.mxu0 0
        %1072 = vmatprep.subr.bf16.mxu0 0
        %1073 = vmatpush1.bf16.msra.mxu0 0
        %1074 = vmatprep.subr.bf16.mxu0 0
        %1075 = vmatpush1.bf16.msra.mxu0 0
        %1076 = vmatprep.subr.bf16.mxu0 0
        %1077 = vmatpush1.bf16.msra.mxu0 0
        %1078 = vmatprep.subr.bf16.mxu0 0
        %1079 = vmatpush1.bf16.msra.mxu0 0
        %1080 = vmatprep.subr.bf16.mxu0 0
        %1081 = vmatpush1.bf16.msra.mxu0 0
        %1082 = vmatprep.mubr.bf16.mxu0 0
        %1083 = vmatmul.mubr.bf16.gmra.mrb[0].mxu0 %v1048
        %v1084 = vpop.f32.mrb[0].mxu0
        %v1085 = vadd.f32 %v1045, %v1084
        %v1086 = vpop.f32.mrb[0].mxu0
        %v1087 = vpop.f32.mrb[0].mxu0
        %v1088 = vpop.f32.mrb[0].mxu0
        %1089 = vdwg.mxu0
        %v1090 = vsel %vm529, %v1085, 0.0
        %1091 = vadd.xlane.f32.xlu0 %v1090
        %v1092 = vpop.xlane.xlu0 %1091
        %v1093 = vmul.f32 %v1092, %v533
        %v1094 = vsub.f32 %v1085, %v1093
        %v1095 = vmul.f32 %v1094, %v1094
        %v1096 = vsel %vm529, %v1095, 0.0
        %1097 = vadd.xlane.f32.xlu0 %v1096
        %v1098 = vpop.xlane.xlu0 %1097
        %v1099 = vmul.f32 %v1098, %v533
        %v1100 = vadd.f32 %v1099, 1e-05
        %v1101 = vrsqrt.pop %v1100
        %v1102 = vmul.f32 %v1094, %v1101
        %1103 = vrot.lane.b32.xlu0 %v724, 96
        %v1104 = vpop.permute.xlu0 %1103
        %v1106 = vmul.f32 %v1102, %v1104
        %1107 = vrot.lane.b32.xlu0 %v731, 96
        %v1108 = vpop.permute.xlu0 %1107
        %v1110 = vadd.f32 %v1106, %v1108
        %vm1111 = vcmp.ge.f32.partialorder %v1110, 0.0
        %v1112 = vmul.f32 %v1110, 0.01
        %v1113 = vsel %vm1111, %v1110, %v1112
        %1115 = vrot.lane.b32.xlu0 %v925, 16
        %v1116 = vpop.permute.xlu0 %1115
        %1119 = vrot.lane.b32.xlu0 %v1113, 32
        %v1120 = vpop.permute.xlu0 %1119
        %v1122 = vsel %vm529, %v736, %v1116
        %vm1123 = vcmask 261120
        %v1124 = vsel %vm1123, %v1122, %v1120
        %vm1125 = vcmask 392192
        %1126 = vst.msk [vmem:[%s446] sm:$0xff] %vm1125, %v1124
        %s1127 = sand.u32 %s314, 1
        %s1128 = scalar_lea.sflag [#allocation4], %s1127
        %s1129 = sand.u32 %s314, 1
        %s1130 = smul.addr %s1129, 8
        %s1131 = scalar_lea.vmem [#allocation5], %s1130
        // Predicated region
        $region77: #{tpu_custom_call.1} parent=71 // pred_check
          %p1132 = pneg %p324
        $region78: #{tpu_custom_call.1} parent=71 // pred_check_branch
          %1134 = sbr.rel (%p1132) target = $region80
        $region79: #{tpu_custom_call.1} parent=71 // pred_region
          %s1136 = ssub.s32 128, 128
          %1137 = vsyncadd %s1128, %s1136
          %s1138 = smul.addr %s28, 128
          %s1139 = scalar_lea.hbm %s13, %s1138
          %s1141 = sshll.u32 %s1131, 4
          %s1142 = int_to_ptr.vmem [resolvable:$true] %s1141
          %1144 = dma.vmem_to_hbm [thread:$0]  %s1142, 128, %s1139, %s1128
        $region80: #{tpu_custom_call.1} parent=71 // pred_fallthru
          _
      $region72: #{tpu_custom_call.1} parent=5 // pred_fallthru
        _
      %p1145 = scmp.le.s32.totalorder 2, %s23
      // Predicated region
      $region81: #{tpu_custom_call.1} parent=5 // pred_check
        %p1146 = pneg %p1145
      $region82: #{tpu_custom_call.1} parent=5 // pred_check_branch
        %1148 = sbr.rel (%p1146) target = $region84
      $region83: #{tpu_custom_call.1} parent=5 // pred_region
        %s1149 = ssub.s32 %s23, 2
        // Predicated region
        $region85: #{tpu_custom_call.1} parent=83 // pred_check
          %p1150 = pneg %p330
        $region86: #{tpu_custom_call.1} parent=83 // pred_check_branch
          %1152 = sbr.rel (%p1150) target = $region88
        $region87: #{tpu_custom_call.1} parent=83 // pred_region
          %s1153 = sand.u32 %s315, 1
          %s1154 = scalar_lea.sflag [#allocation4], %s1153
          %s1155 = sand.u32 %s315, 1
          %s1156 = smul.addr %s1155, 8
          %s1157 = scalar_lea.vmem [#allocation5], %s1156
          %1158 = dma.done %s1154, 128
        $region88: #{tpu_custom_call.1} parent=83 // pred_fallthru
          _
      $region84: #{tpu_custom_call.1} parent=5 // pred_fallthru
        _
    $region6: #{tpu_custom_call.1} parent=1 // loop_footer
      %s27 = sadd.s32 1, %s23
    $region7: #{tpu_custom_call.1} parent=1 // loop_footer_branch
      %22 = sbr.rel target = $region3
    $region8: #{tpu_custom_call.1} parent=1 // loop_exit
      _
    %1159 = vsyncpa [#allocation3], 1
    %s1160 = scalar_lea.sflag [#allocation3], 1
    %1161 = vsyncpa %s1160, 1
    %1162 = vsyncpa [#allocation4], 1
    %s1163 = scalar_lea.sflag [#allocation4], 1
    %1164 = vsyncpa %s1163, 1

</llo_original>
